<compile_context>
chip_gen: v7x
topology: tpu7x:2x2x1
jax: 0.10.0
libtpu: 0.0.40
codegen_flags: <defaults>
</compile_context>

<pallas_src>
import functools

import jax
import jax.numpy as jnp
from jax import lax
from jax.experimental import pallas as pl
from jax.experimental.pallas import tpu as pltpu

LANE = 128
GATE_ALIGN = 32      # pad hidden so 4*h_pad is a multiple of 128 lanes
BATCH_ALIGN = 16     # bf16 gates stream -> 16-sublane batch tiles
MAX_BLOCK_B = 128
MAX_BLOCK_T = 32


def _round_up(x, m):
    return (x + m - 1) // m * m


# -----------------------------------------------------------------------------
# Recurrent kernel.  gx_ref holds the precomputed input projection (+bias) for
# block_t timesteps in bf16; per step the body only does h @ W_hh + gate math.
# Gate order along the 4*h_pad axis is (i, f, o, g), each block h_pad lanes.
# The dense projection is fused at the last time block.
# -----------------------------------------------------------------------------
def lstm_recurrent_kernel(maxlen_ref, gx_ref, len_ref, whh_ref, wd_ref, bd_ref,
                          out_ref, h_scr, c_scr, *, block_t, h_pad):
    b_idx = pl.program_id(0)
    tb = pl.program_id(1)

    @pl.when(tb == 0)
    def _():
        h_scr[...] = jnp.zeros_like(h_scr)
        c_scr[...] = jnp.zeros_like(c_scr)

    t0 = tb * block_t

    # Early exit: skip time blocks where every row of this batch tile is
    # already past its sequence length (state is frozen there anyway).
    @pl.when(t0 < maxlen_ref[b_idx])
    def _():
        lengths = len_ref[...]                               # (Bt, 1) int32

        def step(i, carry):
            h, c = carry                                     # (Bt, Hp) f32
            gx = gx_ref[i].astype(jnp.float32)               # (Bt, 4*Hp)
            # Only MXU operands in bf16; f32 accumulation + f32 elementwise.
            gates = gx + jnp.dot(h.astype(whh_ref.dtype), whh_ref[...],
                                 preferred_element_type=jnp.float32)
            # One sigmoid over the (i, f, o) lanes: EUP exp + approx reciprocal
            # keeps the per-step serial chain off the VALU.
            z = jnp.exp(-gates[:, :3 * h_pad])
            sig = pl.reciprocal(1.0 + z, approx=True)
            i_g = sig[:, 0 * h_pad:1 * h_pad]                # 32-lane slices:
            f_g = sig[:, 1 * h_pad:2 * h_pad]                # XLU rotate/mask,
            o_g = sig[:, 2 * h_pad:3 * h_pad]                # essentially free
            g_g = jnp.tanh(gates[:, 3 * h_pad:4 * h_pad])
            c_new = f_g * c + i_g * g_g
            h_new = o_g * jnp.tanh(c_new)
            # PyTorch packed-sequence semantics: freeze state at t >= length.
            valid = (t0 + i) < lengths                       # (Bt, 1) bool
            return jnp.where(valid, h_new, h), jnp.where(valid, c_new, c)

        h, c = lax.fori_loop(0, block_t, step, (h_scr[...], c_scr[...]),
                             unroll=True)
        h_scr[...] = h
        c_scr[...] = c

    # Fused dense projection (kept OUTSIDE the skip guard so the output block
    # is always written, even for fully padded tail blocks).
    @pl.when(tb == pl.num_programs(1) - 1)
    def _():
        out_ref[...] = (jnp.dot(h_scr[...], wd_ref[...],
                                preferred_element_type=jnp.float32)
                        + bd_ref[...]).astype(out_ref.dtype)


def lstm_forward(gates_x, lengths, maxlens, w_hh_p, w_dense_p, b_dense_p, *,
                 block_b, block_t):
    t_p, b_p, g4 = gates_x.shape
    h_pad = w_hh_p.shape[0]
    o_p = w_dense_p.shape[1]
    assert b_p % block_b == 0 and t_p % block_t == 0
    nb = b_p // block_b
    nt = t_p // block_t

    flops = (2 * t_p * b_p * h_pad * g4            # recurrent matmul
             + 12 * t_p * b_p * h_pad              # gate elementwise
             + 2 * b_p * h_pad * o_p)              # fused dense
    transcendentals = t_p * b_p * 8 * h_pad
    bytes_accessed = (gates_x.size * gates_x.dtype.itemsize
                      + lengths.size * 4
                      + w_hh_p.size * w_hh_p.dtype.itemsize
                      + w_dense_p.size * 4 + b_dense_p.size * 4
                      + b_p * o_p * 4)

    return pl.pallas_call(
        functools.partial(lstm_recurrent_kernel, block_t=block_t, h_pad=h_pad),
        out_shape=jax.ShapeDtypeStruct((b_p, o_p), jnp.float32),
        grid_spec=pltpu.PrefetchScalarGridSpec(
            num_scalar_prefetch=1,                 # per-batch-tile max length
            grid=(nb, nt),                         # batch tiles outer, time inner
            in_specs=[
                # precomputed input-gate pre-activations (bf16 stream)
                pl.BlockSpec((block_t, block_b, g4), lambda b, t, ml: (t, b, 0)),
                # per-row sequence lengths
                pl.BlockSpec((block_b, 1), lambda b, t, ml: (b, 0)),
                # loop-invariant recurrent weights (bf16, MXU operand only)
                # TODO(synk): pipeline_mode=pl.Buffered(1) + vmem_limit_bytes
                # once H is scaled far enough that a double-buffered (Hp,4Hp)
                # weight matters against v7x's 32 MiB scoped VMEM.
                pl.BlockSpec((h_pad, g4), lambda b, t, ml: (0, 0)),
                # fused dense weights / bias (tiny, loop-invariant)
                pl.BlockSpec((h_pad, o_p), lambda b, t, ml: (0, 0)),
                pl.BlockSpec((1, o_p), lambda b, t, ml: (0, 0)),
            ],
            out_specs=pl.BlockSpec((block_b, o_p), lambda b, t, ml: (b, 0)),
            scratch_shapes=[
                pltpu.VMEM((block_b, h_pad), jnp.float32),   # h state
                pltpu.VMEM((block_b, h_pad), jnp.float32),   # c state
            ],
        ),
        compiler_params=pltpu.CompilerParams(
            # Batch tiles are independent (only pays on v7x when nb >= 2;
            # single-TC v5e/v6e ignore it).  Time axis is a recurrence.
            dimension_semantics=("parallel", "arbitrary")),
        cost_estimate=pl.CostEstimate(flops=flops,
                                      transcendentals=transcendentals,
                                      bytes_accessed=bytes_accessed),
    )(maxlens, gates_x, lengths, w_hh_p, w_dense_p, b_dense_p)


def prepare_params(embedding, w_ih, w_hh, b_ih, b_hh, w_dense, b_dense,
                   hidden_dim):
    """Repack PyTorch-layout params for the TPU kernel.

    - transpose weights to (in_features, out_features)
    - reorder LSTM gate blocks (i, f, g, o) -> (i, f, o, g)
    - pad hidden to a multiple of 32 so the PACKED 4*h axis is a lane multiple
      (no per-gate 128 padding); output dim padded to 128 lanes
    - store W_hh in bf16 (MXU operand only)
    """
    h = hidden_dim
    h_pad = _round_up(h, GATE_ALIGN)      # 4*h_pad is a multiple of 128
    o = w_dense.shape[0]
    o_p = _round_up(o, LANE)

    def reorder_pad(w_t):       # w_t: (in, 4H), PyTorch gate order (i, f, g, o)
        i, f, g, og = (w_t[:, k * h:(k + 1) * h] for k in range(4))
        pad = [(0, 0), (0, h_pad - h)]
        # (i, f, o, g): contiguous sigmoid over the first 3*h_pad lanes
        return jnp.concatenate([jnp.pad(blk, pad) for blk in (i, f, og, g)],
                               axis=-1)

    w_ih_p = reorder_pad(w_ih.T)                                     # (E, 4*Hp)
    w_hh_p = jnp.pad(reorder_pad(w_hh.T),
                     [(0, h_pad - h), (0, 0)]).astype(jnp.bfloat16)  # (Hp, 4*Hp)
    bias_p = reorder_pad((b_ih + b_hh)[None, :])                     # (1, 4*Hp)
    w_dense_p = jnp.pad(w_dense.T, [(0, h_pad - h), (0, o_p - o)])   # (Hp, Op)
    b_dense_p = jnp.pad(b_dense[None, :], [(0, 0), (0, o_p - o)])    # (1, Op)

    return {"embedding": embedding, "w_ih": w_ih_p, "w_hh": w_hh_p,
            "bias": bias_p, "w_dense": w_dense_p, "b_dense": b_dense_p,
            "hidden_dim": h, "output_dim": o}


def model_forward(text_indices, params):
    """Full module forward: embedding + dynamic LSTM + dense."""
    bsz, seq = text_indices.shape
    out_dim = params["output_dim"]

    # Embedding lookup + lengths (plain-JAX glue; gather has no Pallas win here).
    x = params["embedding"][text_indices]                            # (B, T, E)
    x_len = jnp.sum(text_indices != 0, axis=-1).astype(jnp.int32)    # (B,)

    block_b = min(_round_up(bsz, BATCH_ALIGN), MAX_BLOCK_B)
    b_p = _round_up(bsz, block_b)
    block_t = min(_round_up(seq, 8), MAX_BLOCK_T)
    t_p = _round_up(seq, block_t)

    # Time-major layout + padding (padded rows get length 0 -> state stays 0).
    x_tbe = jnp.transpose(x, (1, 0, 2))                              # (T, B, E)
    x_tbe = jnp.pad(x_tbe, [(0, t_p - seq), (0, b_p - bsz), (0, 0)])
    lengths = jnp.pad(x_len, (0, b_p - bsz))                         # (Bp,)
    maxlens = jnp.max(lengths.reshape(b_p // block_b, block_b), axis=1)  # (nb,)

    # Hoisted input projection: one big MXU-filling matmul in XLA; stream the
    # result into the recurrent kernel in bf16 (dominant HBM traffic halved).
    e = x_tbe.shape[-1]
    g4 = params["w_ih"].shape[-1]
    gates_x = (x_tbe.reshape(t_p * b_p, e) @ params["w_ih"]
               ).reshape(t_p, b_p, g4) + params["bias"]              # (Tp, Bp, 4Hp)
    gates_x = gates_x.astype(jnp.bfloat16)

    logits_p = lstm_forward(gates_x, lengths[:, None], maxlens,
                            params["w_hh"], params["w_dense"],
                            params["b_dense"],
                            block_b=block_b, block_t=block_t)
    return {"logits": logits_p[:bsz, :out_dim]}


if __name__ == "__main__":
    B, T, E, H, O = 8, 8, 64, 32, 3
    VOCAB = 50

    key = jax.random.PRNGKey(0)
    ks = jax.random.split(key, 8)

    # Deterministic tokens in [1, VOCAB) with variable lengths (0 = padding).
    text_indices = jax.random.randint(ks[0], (B, T), 1, VOCAB, dtype=jnp.int32)
    seq_lens = jnp.array([T, T - 1, T - 3, 5, 4, 3, 2, 1], dtype=jnp.int32)
    pos = jnp.arange(T, dtype=jnp.int32)[None, :]
    text_indices = jnp.where(pos < seq_lens[:, None], text_indices, 0)

    # PyTorch-layout parameters (gate order i,f,g,o; weights (out,in)).
    emb = jax.random.normal(ks[1], (VOCAB, E), jnp.float32) * 0.1
    emb = emb.at[0].set(0.0)                       # padding row
    w_ih = jax.random.normal(ks[2], (4 * H, E), jnp.float32) * 0.1
    w_hh = jax.random.normal(ks[3], (4 * H, H), jnp.float32) * 0.1
    b_ih = jax.random.normal(ks[4], (4 * H,), jnp.float32) * 0.1
    b_hh = jax.random.normal(ks[5], (4 * H,), jnp.float32) * 0.1
    w_dense = jax.random.normal(ks[6], (O, H), jnp.float32) * 0.1
    b_dense = jax.random.normal(ks[7], (O,), jnp.float32) * 0.1

    params = prepare_params(emb, w_ih, w_hh, b_ih, b_hh, w_dense, b_dense, H)

    out = model_forward(text_indices, params)
    logits = jax.block_until_ready(out["logits"])
    assert logits.shape == (B, O)

    # Pure-JAX f32 reference (exact sigmoid / no bf16) with the same
    # packed-sequence semantics; loose tolerance covers bf16 + approx recip.
    def reference(tok):
        x = emb[tok]
        x_len = jnp.sum(tok != 0, axis=-1)
        h = jnp.zeros((B, H), jnp.float32)
        c = jnp.zeros((B, H), jnp.float32)
        for t in range(T):
            gates = x[:, t] @ w_ih.T + b_ih + h @ w_hh.T + b_hh
            i_g, f_g, g_g, o_g = jnp.split(gates, 4, axis=-1)
            i_g = jax.nn.sigmoid(i_g)
            f_g = jax.nn.sigmoid(f_g)
            o_g = jax.nn.sigmoid(o_g)
            g_g = jnp.tanh(g_g)
            c_new = f_g * c + i_g * g_g
            h_new = o_g * jnp.tanh(c_new)
            valid = (t < x_len)[:, None]
            h = jnp.where(valid, h_new, h)
            c = jnp.where(valid, c_new, c)
        return h @ w_dense.T + b_dense

    ref_logits = reference(text_indices)
    err = float(jnp.max(jnp.abs(logits - ref_logits)))
    assert err < 5e-2, f"max abs err vs reference: {err}"
    print("KERNEL_OK")
</pallas_src>

<mosaic_0001>
module attributes {stable_mosaic.version = 11 : i64} {
  func.func @lstm_recurrent_kernel(%arg0: i32, %arg1: i32, %arg2: memref<1xi32, #tpu.memory_space<smem>>, %arg3: memref<8x16x128xbf16, #tpu.memory_space<vmem>>, %arg4: memref<16x1xi32, #tpu.memory_space<vmem>>, %arg5: memref<32x128xbf16, #tpu.memory_space<vmem>>, %arg6: memref<32x128xf32, #tpu.memory_space<vmem>>, %arg7: memref<1x128xf32, #tpu.memory_space<vmem>>, %arg8: memref<16x128xf32, #tpu.memory_space<vmem>>, %arg9: memref<16x32xf32, #tpu.memory_space<vmem>>, %arg10: memref<16x32xf32, #tpu.memory_space<vmem>>) attributes {dimension_semantics = [#tpu.dimension_semantics<parallel>, #tpu.dimension_semantics<arbitrary>], iteration_bounds = array<i64: 1, 1>, scalar_prefetch = 1 : i64, scratch_operands = 2 : i64, tpu.core_type = #tpu.core_type<tc>, window_params = [{transform_indices = @transform_0, window_bounds = array<i64: 8, 16, 128>}, {transform_indices = @transform_1, window_bounds = array<i64: 16, 1>}, {pipeline_mode = #tpu.pipeline_mode<synchronous>, transform_indices = @transform_2, window_bounds = array<i64: 32, 128>}, {pipeline_mode = #tpu.pipeline_mode<synchronous>, transform_indices = @transform_3, window_bounds = array<i64: 32, 128>}, {pipeline_mode = #tpu.pipeline_mode<synchronous>, transform_indices = @transform_4, window_bounds = array<i64: 1, 128>}, {transform_indices = @transform_5, window_bounds = array<i64: 16, 128>}]} {
    %c0_i32 = arith.constant 0 : i32
    %0 = arith.cmpi eq, %arg1, %c0_i32 : i32
    %1 = arith.extui %0 : i1 to i32
    %c0_i32_0 = arith.constant 0 : i32
    %2 = arith.cmpi ne, %1, %c0_i32_0 : i32
    scf.if %2 {
      %cst = arith.constant 0.000000e+00 : f32
      %12 = vector.broadcast %cst : f32 to vector<16x32xf32>
      %c0 = arith.constant 0 : index
      %c0_4 = arith.constant 0 : index
      %13 = vector.load %arg9[%c0, %c0_4] : memref<16x32xf32, #tpu.memory_space<vmem>>, vector<16x32xf32>
      tpu.vector_store %arg9[%c0, %c0_4], %12 {strides = array<i32>} : memref<16x32xf32, #tpu.memory_space<vmem>>, vector<16x32xf32>,
      %cst_5 = arith.constant 0.000000e+00 : f32
      %14 = vector.broadcast %cst_5 : f32 to vector<16x32xf32>
      %c0_6 = arith.constant 0 : index
      %c0_7 = arith.constant 0 : index
      %15 = vector.load %arg10[%c0_6, %c0_7] : memref<16x32xf32, #tpu.memory_space<vmem>>, vector<16x32xf32>
      tpu.vector_store %arg10[%c0_6, %c0_7], %14 {strides = array<i32>} : memref<16x32xf32, #tpu.memory_space<vmem>>, vector<16x32xf32>,
    } else {
    }
    %c8_i32 = arith.constant 8 : i32
    %3 = arith.muli %arg1, %c8_i32 : i32
    %4 = arith.index_cast %arg0 : i32 to index
    %5 = memref.load %arg2[%4] : memref<1xi32, #tpu.memory_space<smem>>
    %6 = arith.cmpi slt, %3, %5 : i32
    %7 = arith.extui %6 : i1 to i32
    %c0_i32_1 = arith.constant 0 : i32
    %8 = arith.cmpi ne, %7, %c0_i32_1 : i32
    scf.if %8 {
      %c0 = arith.constant 0 : index
      %c0_4 = arith.constant 0 : index
      %12 = vector.load %arg4[%c0, %c0_4] : memref<16x1xi32, #tpu.memory_space<vmem>>, vector<16x1xi32>
      %c0_5 = arith.constant 0 : index
      %c0_6 = arith.constant 0 : index
      %13 = vector.load %arg9[%c0_5, %c0_6] : memref<16x32xf32, #tpu.memory_space<vmem>>, vector<16x32xf32>
      %c0_7 = arith.constant 0 : index
      %c0_8 = arith.constant 0 : index
      %14 = vector.load %arg10[%c0_7, %c0_8] : memref<16x32xf32, #tpu.memory_space<vmem>>, vector<16x32xf32>
      %c0_i32_9 = arith.constant 0 : i32
      %15 = arith.index_cast %c0_i32_9 : i32 to index
      %c0_10 = arith.constant 0 : index
      %c0_11 = arith.constant 0 : index
      %16 = vector.load %arg3[%15, %c0_10, %c0_11] : memref<8x16x128xbf16, #tpu.memory_space<vmem>>, vector<1x16x128xbf16>
      %17 = vector.shape_cast %16 : vector<1x16x128xbf16> to vector<16x128xbf16>
      %18 = arith.extf %17 : vector<16x128xbf16> to vector<16x128xf32>
      %19 = arith.truncf %13 : vector<16x32xf32> to vector<16x32xbf16>
      %c0_12 = arith.constant 0 : index
      %c0_13 = arith.constant 0 : index
      %20 = vector.load %arg5[%c0_12, %c0_13] : memref<32x128xbf16, #tpu.memory_space<vmem>>, vector<32x128xbf16>
      %cst = arith.constant dense<0.000000e+00> : vector<16x128xf32>
      %21 = tpu.matmul %19, %20, %cst {dimension_numbers = #tpu.dot_dimension_numbers<[1], [0], [0], [1], [0, 0, 1, 1], [], []>} : vector<16x32xbf16>, vector<32x128xbf16>, vector<16x128xf32> -> vector<16x128xf32>
      %22 = arith.addf %18, %21 : vector<16x128xf32>
      %23 = vector.extract_strided_slice %22 {offsets = [0, 0], sizes = [16, 96], strides = [1, 1]} : vector<16x128xf32> to vector<16x96xf32>
      %cst_14 = arith.constant 0.000000e+00 : f32
      %24 = vector.broadcast %cst_14 : f32 to vector<16x96xf32>
      %25 = arith.subf %24, %23 : vector<16x96xf32>
      %26 = math.exp %25 : vector<16x96xf32>
      %cst_15 = arith.constant 1.000000e+00 : f32
      %27 = vector.broadcast %cst_15 : f32 to vector<16x96xf32>
      %28 = arith.addf %27, %26 : vector<16x96xf32>
      %29 = tpu.reciprocal %28 {approx = true} : vector<16x96xf32> -> vector<16x96xf32>
      %30 = vector.extract_strided_slice %29 {offsets = [0, 0], sizes = [16, 32], strides = [1, 1]} : vector<16x96xf32> to vector<16x32xf32>
      %31 = vector.extract_strided_slice %29 {offsets = [0, 32], sizes = [16, 32], strides = [1, 1]} : vector<16x96xf32> to vector<16x32xf32>
      %32 = vector.extract_strided_slice %29 {offsets = [0, 64], sizes = [16, 32], strides = [1, 1]} : vector<16x96xf32> to vector<16x32xf32>
      %33 = vector.extract_strided_slice %22 {offsets = [0, 96], sizes = [16, 32], strides = [1, 1]} : vector<16x128xf32> to vector<16x32xf32>
      %34 = math.tanh %33 : vector<16x32xf32>
      %35 = arith.mulf %31, %14 : vector<16x32xf32>
      %36 = arith.mulf %30, %34 : vector<16x32xf32>
      %37 = arith.addf %35, %36 : vector<16x32xf32>
      %38 = math.tanh %37 : vector<16x32xf32>
      %39 = arith.mulf %32, %38 : vector<16x32xf32>
      %40 = arith.addi %3, %c0_i32_9 : i32
      %41 = vector.broadcast %40 : i32 to vector<16x1xi32>
      %42 = arith.cmpi slt, %41, %12 : vector<16x1xi32>
      %43 = vector.shape_cast %42 : vector<16x1xi1> to vector<16x1xi1>
      %44 = vector.broadcast %43 : vector<16x1xi1> to vector<16x32xi1>
      %45 = arith.select %44, %39, %13 : vector<16x32xi1>, vector<16x32xf32>
      %46 = vector.shape_cast %42 : vector<16x1xi1> to vector<16x1xi1>
      %47 = vector.broadcast %46 : vector<16x1xi1> to vector<16x32xi1>
      %48 = arith.select %47, %37, %14 : vector<16x32xi1>, vector<16x32xf32>
      %c1_i32 = arith.constant 1 : i32
      %49 = arith.index_cast %c1_i32 : i32 to index
      %c0_16 = arith.constant 0 : index
      %c0_17 = arith.constant 0 : index
      %50 = vector.load %arg3[%49, %c0_16, %c0_17] : memref<8x16x128xbf16, #tpu.memory_space<vmem>>, vector<1x16x128xbf16>
      %51 = vector.shape_cast %50 : vector<1x16x128xbf16> to vector<16x128xbf16>
      %52 = arith.extf %51 : vector<16x128xbf16> to vector<16x128xf32>
      %53 = arith.truncf %45 : vector<16x32xf32> to vector<16x32xbf16>
      %c0_18 = arith.constant 0 : index
      %c0_19 = arith.constant 0 : index
      %54 = vector.load %arg5[%c0_18, %c0_19] : memref<32x128xbf16, #tpu.memory_space<vmem>>, vector<32x128xbf16>
      %cst_20 = arith.constant dense<0.000000e+00> : vector<16x128xf32>
      %55 = tpu.matmul %53, %54, %cst_20 {dimension_numbers = #tpu.dot_dimension_numbers<[1], [0], [0], [1], [0, 0, 1, 1], [], []>} : vector<16x32xbf16>, vector<32x128xbf16>, vector<16x128xf32> -> vector<16x128xf32>
      %56 = arith.addf %52, %55 : vector<16x128xf32>
      %57 = vector.extract_strided_slice %56 {offsets = [0, 0], sizes = [16, 96], strides = [1, 1]} : vector<16x128xf32> to vector<16x96xf32>
      %cst_21 = arith.constant 0.000000e+00 : f32
      %58 = vector.broadcast %cst_21 : f32 to vector<16x96xf32>
      %59 = arith.subf %58, %57 : vector<16x96xf32>
      %60 = math.exp %59 : vector<16x96xf32>
      %cst_22 = arith.constant 1.000000e+00 : f32
      %61 = vector.broadcast %cst_22 : f32 to vector<16x96xf32>
      %62 = arith.addf %61, %60 : vector<16x96xf32>
      %63 = tpu.reciprocal %62 {approx = true} : vector<16x96xf32> -> vector<16x96xf32>
      %64 = vector.extract_strided_slice %63 {offsets = [0, 0], sizes = [16, 32], strides = [1, 1]} : vector<16x96xf32> to vector<16x32xf32>
      %65 = vector.extract_strided_slice %63 {offsets = [0, 32], sizes = [16, 32], strides = [1, 1]} : vector<16x96xf32> to vector<16x32xf32>
      %66 = vector.extract_strided_slice %63 {offsets = [0, 64], sizes = [16, 32], strides = [1, 1]} : vector<16x96xf32> to vector<16x32xf32>
      %67 = vector.extract_strided_slice %56 {offsets = [0, 96], sizes = [16, 32], strides = [1, 1]} : vector<16x128xf32> to vector<16x32xf32>
      %68 = math.tanh %67 : vector<16x32xf32>
      %69 = arith.mulf %65, %48 : vector<16x32xf32>
      %70 = arith.mulf %64, %68 : vector<16x32xf32>
      %71 = arith.addf %69, %70 : vector<16x32xf32>
      %72 = math.tanh %71 : vector<16x32xf32>
      %73 = arith.mulf %66, %72 : vector<16x32xf32>
      %74 = arith.addi %3, %c1_i32 : i32
      %75 = vector.broadcast %74 : i32 to vector<16x1xi32>
      %76 = arith.cmpi slt, %75, %12 : vector<16x1xi32>
      %77 = vector.shape_cast %76 : vector<16x1xi1> to vector<16x1xi1>
      %78 = vector.broadcast %77 : vector<16x1xi1> to vector<16x32xi1>
      %79 = arith.select %78, %73, %45 : vector<16x32xi1>, vector<16x32xf32>
      %80 = vector.shape_cast %76 : vector<16x1xi1> to vector<16x1xi1>
      %81 = vector.broadcast %80 : vector<16x1xi1> to vector<16x32xi1>
      %82 = arith.select %81, %71, %48 : vector<16x32xi1>, vector<16x32xf32>
      %c2_i32 = arith.constant 2 : i32
      %83 = arith.index_cast %c2_i32 : i32 to index
      %c0_23 = arith.constant 0 : index
      %c0_24 = arith.constant 0 : index
      %84 = vector.load %arg3[%83, %c0_23, %c0_24] : memref<8x16x128xbf16, #tpu.memory_space<vmem>>, vector<1x16x128xbf16>
      %85 = vector.shape_cast %84 : vector<1x16x128xbf16> to vector<16x128xbf16>
      %86 = arith.extf %85 : vector<16x128xbf16> to vector<16x128xf32>
      %87 = arith.truncf %79 : vector<16x32xf32> to vector<16x32xbf16>
      %c0_25 = arith.constant 0 : index
      %c0_26 = arith.constant 0 : index
      %88 = vector.load %arg5[%c0_25, %c0_26] : memref<32x128xbf16, #tpu.memory_space<vmem>>, vector<32x128xbf16>
      %cst_27 = arith.constant dense<0.000000e+00> : vector<16x128xf32>
      %89 = tpu.matmul %87, %88, %cst_27 {dimension_numbers = #tpu.dot_dimension_numbers<[1], [0], [0], [1], [0, 0, 1, 1], [], []>} : vector<16x32xbf16>, vector<32x128xbf16>, vector<16x128xf32> -> vector<16x128xf32>
      %90 = arith.addf %86, %89 : vector<16x128xf32>
      %91 = vector.extract_strided_slice %90 {offsets = [0, 0], sizes = [16, 96], strides = [1, 1]} : vector<16x128xf32> to vector<16x96xf32>
      %cst_28 = arith.constant 0.000000e+00 : f32
      %92 = vector.broadcast %cst_28 : f32 to vector<16x96xf32>
      %93 = arith.subf %92, %91 : vector<16x96xf32>
      %94 = math.exp %93 : vector<16x96xf32>
      %cst_29 = arith.constant 1.000000e+00 : f32
      %95 = vector.broadcast %cst_29 : f32 to vector<16x96xf32>
      %96 = arith.addf %95, %94 : vector<16x96xf32>
      %97 = tpu.reciprocal %96 {approx = true} : vector<16x96xf32> -> vector<16x96xf32>
      %98 = vector.extract_strided_slice %97 {offsets = [0, 0], sizes = [16, 32], strides = [1, 1]} : vector<16x96xf32> to vector<16x32xf32>
      %99 = vector.extract_strided_slice %97 {offsets = [0, 32], sizes = [16, 32], strides = [1, 1]} : vector<16x96xf32> to vector<16x32xf32>
      %100 = vector.extract_strided_slice %97 {offsets = [0, 64], sizes = [16, 32], strides = [1, 1]} : vector<16x96xf32> to vector<16x32xf32>
      %101 = vector.extract_strided_slice %90 {offsets = [0, 96], sizes = [16, 32], strides = [1, 1]} : vector<16x128xf32> to vector<16x32xf32>
      %102 = math.tanh %101 : vector<16x32xf32>
      %103 = arith.mulf %99, %82 : vector<16x32xf32>
      %104 = arith.mulf %98, %102 : vector<16x32xf32>
      %105 = arith.addf %103, %104 : vector<16x32xf32>
      %106 = math.tanh %105 : vector<16x32xf32>
      %107 = arith.mulf %100, %106 : vector<16x32xf32>
      %108 = arith.addi %3, %c2_i32 : i32
      %109 = vector.broadcast %108 : i32 to vector<16x1xi32>
      %110 = arith.cmpi slt, %109, %12 : vector<16x1xi32>
      %111 = vector.shape_cast %110 : vector<16x1xi1> to vector<16x1xi1>
      %112 = vector.broadcast %111 : vector<16x1xi1> to vector<16x32xi1>
      %113 = arith.select %112, %107, %79 : vector<16x32xi1>, vector<16x32xf32>
      %114 = vector.shape_cast %110 : vector<16x1xi1> to vector<16x1xi1>
      %115 = vector.broadcast %114 : vector<16x1xi1> to vector<16x32xi1>
      %116 = arith.select %115, %105, %82 : vector<16x32xi1>, vector<16x32xf32>
      %c3_i32 = arith.constant 3 : i32
      %117 = arith.index_cast %c3_i32 : i32 to index
      %c0_30 = arith.constant 0 : index
      %c0_31 = arith.constant 0 : index
      %118 = vector.load %arg3[%117, %c0_30, %c0_31] : memref<8x16x128xbf16, #tpu.memory_space<vmem>>, vector<1x16x128xbf16>
      %119 = vector.shape_cast %118 : vector<1x16x128xbf16> to vector<16x128xbf16>
      %120 = arith.extf %119 : vector<16x128xbf16> to vector<16x128xf32>
      %121 = arith.truncf %113 : vector<16x32xf32> to vector<16x32xbf16>
      %c0_32 = arith.constant 0 : index
      %c0_33 = arith.constant 0 : index
      %122 = vector.load %arg5[%c0_32, %c0_33] : memref<32x128xbf16, #tpu.memory_space<vmem>>, vector<32x128xbf16>
      %cst_34 = arith.constant dense<0.000000e+00> : vector<16x128xf32>
      %123 = tpu.matmul %121, %122, %cst_34 {dimension_numbers = #tpu.dot_dimension_numbers<[1], [0], [0], [1], [0, 0, 1, 1], [], []>} : vector<16x32xbf16>, vector<32x128xbf16>, vector<16x128xf32> -> vector<16x128xf32>
      %124 = arith.addf %120, %123 : vector<16x128xf32>
      %125 = vector.extract_strided_slice %124 {offsets = [0, 0], sizes = [16, 96], strides = [1, 1]} : vector<16x128xf32> to vector<16x96xf32>
      %cst_35 = arith.constant 0.000000e+00 : f32
      %126 = vector.broadcast %cst_35 : f32 to vector<16x96xf32>
      %127 = arith.subf %126, %125 : vector<16x96xf32>
      %128 = math.exp %127 : vector<16x96xf32>
      %cst_36 = arith.constant 1.000000e+00 : f32
      %129 = vector.broadcast %cst_36 : f32 to vector<16x96xf32>
      %130 = arith.addf %129, %128 : vector<16x96xf32>
      %131 = tpu.reciprocal %130 {approx = true} : vector<16x96xf32> -> vector<16x96xf32>
      %132 = vector.extract_strided_slice %131 {offsets = [0, 0], sizes = [16, 32], strides = [1, 1]} : vector<16x96xf32> to vector<16x32xf32>
      %133 = vector.extract_strided_slice %131 {offsets = [0, 32], sizes = [16, 32], strides = [1, 1]} : vector<16x96xf32> to vector<16x32xf32>
      %134 = vector.extract_strided_slice %131 {offsets = [0, 64], sizes = [16, 32], strides = [1, 1]} : vector<16x96xf32> to vector<16x32xf32>
      %135 = vector.extract_strided_slice %124 {offsets = [0, 96], sizes = [16, 32], strides = [1, 1]} : vector<16x128xf32> to vector<16x32xf32>
      %136 = math.tanh %135 : vector<16x32xf32>
      %137 = arith.mulf %133, %116 : vector<16x32xf32>
      %138 = arith.mulf %132, %136 : vector<16x32xf32>
      %139 = arith.addf %137, %138 : vector<16x32xf32>
      %140 = math.tanh %139 : vector<16x32xf32>
      %141 = arith.mulf %134, %140 : vector<16x32xf32>
      %142 = arith.addi %3, %c3_i32 : i32
      %143 = vector.broadcast %142 : i32 to vector<16x1xi32>
      %144 = arith.cmpi slt, %143, %12 : vector<16x1xi32>
      %145 = vector.shape_cast %144 : vector<16x1xi1> to vector<16x1xi1>
      %146 = vector.broadcast %145 : vector<16x1xi1> to vector<16x32xi1>
      %147 = arith.select %146, %141, %113 : vector<16x32xi1>, vector<16x32xf32>
      %148 = vector.shape_cast %144 : vector<16x1xi1> to vector<16x1xi1>
      %149 = vector.broadcast %148 : vector<16x1xi1> to vector<16x32xi1>
      %150 = arith.select %149, %139, %116 : vector<16x32xi1>, vector<16x32xf32>
      %c4_i32 = arith.constant 4 : i32
      %151 = arith.index_cast %c4_i32 : i32 to index
      %c0_37 = arith.constant 0 : index
      %c0_38 = arith.constant 0 : index
      %152 = vector.load %arg3[%151, %c0_37, %c0_38] : memref<8x16x128xbf16, #tpu.memory_space<vmem>>, vector<1x16x128xbf16>
      %153 = vector.shape_cast %152 : vector<1x16x128xbf16> to vector<16x128xbf16>
      %154 = arith.extf %153 : vector<16x128xbf16> to vector<16x128xf32>
      %155 = arith.truncf %147 : vector<16x32xf32> to vector<16x32xbf16>
      %c0_39 = arith.constant 0 : index
      %c0_40 = arith.constant 0 : index
      %156 = vector.load %arg5[%c0_39, %c0_40] : memref<32x128xbf16, #tpu.memory_space<vmem>>, vector<32x128xbf16>
      %cst_41 = arith.constant dense<0.000000e+00> : vector<16x128xf32>
      %157 = tpu.matmul %155, %156, %cst_41 {dimension_numbers = #tpu.dot_dimension_numbers<[1], [0], [0], [1], [0, 0, 1, 1], [], []>} : vector<16x32xbf16>, vector<32x128xbf16>, vector<16x128xf32> -> vector<16x128xf32>
      %158 = arith.addf %154, %157 : vector<16x128xf32>
      %159 = vector.extract_strided_slice %158 {offsets = [0, 0], sizes = [16, 96], strides = [1, 1]} : vector<16x128xf32> to vector<16x96xf32>
      %cst_42 = arith.constant 0.000000e+00 : f32
      %160 = vector.broadcast %cst_42 : f32 to vector<16x96xf32>
      %161 = arith.subf %160, %159 : vector<16x96xf32>
      %162 = math.exp %161 : vector<16x96xf32>
      %cst_43 = arith.constant 1.000000e+00 : f32
      %163 = vector.broadcast %cst_43 : f32 to vector<16x96xf32>
      %164 = arith.addf %163, %162 : vector<16x96xf32>
      %165 = tpu.reciprocal %164 {approx = true} : vector<16x96xf32> -> vector<16x96xf32>
      %166 = vector.extract_strided_slice %165 {offsets = [0, 0], sizes = [16, 32], strides = [1, 1]} : vector<16x96xf32> to vector<16x32xf32>
      %167 = vector.extract_strided_slice %165 {offsets = [0, 32], sizes = [16, 32], strides = [1, 1]} : vector<16x96xf32> to vector<16x32xf32>
      %168 = vector.extract_strided_slice %165 {offsets = [0, 64], sizes = [16, 32], strides = [1, 1]} : vector<16x96xf32> to vector<16x32xf32>
      %169 = vector.extract_strided_slice %158 {offsets = [0, 96], sizes = [16, 32], strides = [1, 1]} : vector<16x128xf32> to vector<16x32xf32>
      %170 = math.tanh %169 : vector<16x32xf32>
      %171 = arith.mulf %167, %150 : vector<16x32xf32>
      %172 = arith.mulf %166, %170 : vector<16x32xf32>
      %173 = arith.addf %171, %172 : vector<16x32xf32>
      %174 = math.tanh %173 : vector<16x32xf32>
      %175 = arith.mulf %168, %174 : vector<16x32xf32>
      %176 = arith.addi %3, %c4_i32 : i32
      %177 = vector.broadcast %176 : i32 to vector<16x1xi32>
      %178 = arith.cmpi slt, %177, %12 : vector<16x1xi32>
      %179 = vector.shape_cast %178 : vector<16x1xi1> to vector<16x1xi1>
      %180 = vector.broadcast %179 : vector<16x1xi1> to vector<16x32xi1>
      %181 = arith.select %180, %175, %147 : vector<16x32xi1>, vector<16x32xf32>
      %182 = vector.shape_cast %178 : vector<16x1xi1> to vector<16x1xi1>
      %183 = vector.broadcast %182 : vector<16x1xi1> to vector<16x32xi1>
      %184 = arith.select %183, %173, %150 : vector<16x32xi1>, vector<16x32xf32>
      %c5_i32 = arith.constant 5 : i32
      %185 = arith.index_cast %c5_i32 : i32 to index
      %c0_44 = arith.constant 0 : index
      %c0_45 = arith.constant 0 : index
      %186 = vector.load %arg3[%185, %c0_44, %c0_45] : memref<8x16x128xbf16, #tpu.memory_space<vmem>>, vector<1x16x128xbf16>
      %187 = vector.shape_cast %186 : vector<1x16x128xbf16> to vector<16x128xbf16>
      %188 = arith.extf %187 : vector<16x128xbf16> to vector<16x128xf32>
      %189 = arith.truncf %181 : vector<16x32xf32> to vector<16x32xbf16>
      %c0_46 = arith.constant 0 : index
      %c0_47 = arith.constant 0 : index
      %190 = vector.load %arg5[%c0_46, %c0_47] : memref<32x128xbf16, #tpu.memory_space<vmem>>, vector<32x128xbf16>
      %cst_48 = arith.constant dense<0.000000e+00> : vector<16x128xf32>
      %191 = tpu.matmul %189, %190, %cst_48 {dimension_numbers = #tpu.dot_dimension_numbers<[1], [0], [0], [1], [0, 0, 1, 1], [], []>} : vector<16x32xbf16>, vector<32x128xbf16>, vector<16x128xf32> -> vector<16x128xf32>
      %192 = arith.addf %188, %191 : vector<16x128xf32>
      %193 = vector.extract_strided_slice %192 {offsets = [0, 0], sizes = [16, 96], strides = [1, 1]} : vector<16x128xf32> to vector<16x96xf32>
      %cst_49 = arith.constant 0.000000e+00 : f32
      %194 = vector.broadcast %cst_49 : f32 to vector<16x96xf32>
      %195 = arith.subf %194, %193 : vector<16x96xf32>
      %196 = math.exp %195 : vector<16x96xf32>
      %cst_50 = arith.constant 1.000000e+00 : f32
      %197 = vector.broadcast %cst_50 : f32 to vector<16x96xf32>
      %198 = arith.addf %197, %196 : vector<16x96xf32>
      %199 = tpu.reciprocal %198 {approx = true} : vector<16x96xf32> -> vector<16x96xf32>
      %200 = vector.extract_strided_slice %199 {offsets = [0, 0], sizes = [16, 32], strides = [1, 1]} : vector<16x96xf32> to vector<16x32xf32>
      %201 = vector.extract_strided_slice %199 {offsets = [0, 32], sizes = [16, 32], strides = [1, 1]} : vector<16x96xf32> to vector<16x32xf32>
      %202 = vector.extract_strided_slice %199 {offsets = [0, 64], sizes = [16, 32], strides = [1, 1]} : vector<16x96xf32> to vector<16x32xf32>
      %203 = vector.extract_strided_slice %192 {offsets = [0, 96], sizes = [16, 32], strides = [1, 1]} : vector<16x128xf32> to vector<16x32xf32>
      %204 = math.tanh %203 : vector<16x32xf32>
      %205 = arith.mulf %201, %184 : vector<16x32xf32>
      %206 = arith.mulf %200, %204 : vector<16x32xf32>
      %207 = arith.addf %205, %206 : vector<16x32xf32>
      %208 = math.tanh %207 : vector<16x32xf32>
      %209 = arith.mulf %202, %208 : vector<16x32xf32>
      %210 = arith.addi %3, %c5_i32 : i32
      %211 = vector.broadcast %210 : i32 to vector<16x1xi32>
      %212 = arith.cmpi slt, %211, %12 : vector<16x1xi32>
      %213 = vector.shape_cast %212 : vector<16x1xi1> to vector<16x1xi1>
      %214 = vector.broadcast %213 : vector<16x1xi1> to vector<16x32xi1>
      %215 = arith.select %214, %209, %181 : vector<16x32xi1>, vector<16x32xf32>
      %216 = vector.shape_cast %212 : vector<16x1xi1> to vector<16x1xi1>
      %217 = vector.broadcast %216 : vector<16x1xi1> to vector<16x32xi1>
      %218 = arith.select %217, %207, %184 : vector<16x32xi1>, vector<16x32xf32>
      %c6_i32 = arith.constant 6 : i32
      %219 = arith.index_cast %c6_i32 : i32 to index
      %c0_51 = arith.constant 0 : index
      %c0_52 = arith.constant 0 : index
      %220 = vector.load %arg3[%219, %c0_51, %c0_52] : memref<8x16x128xbf16, #tpu.memory_space<vmem>>, vector<1x16x128xbf16>
      %221 = vector.shape_cast %220 : vector<1x16x128xbf16> to vector<16x128xbf16>
      %222 = arith.extf %221 : vector<16x128xbf16> to vector<16x128xf32>
      %223 = arith.truncf %215 : vector<16x32xf32> to vector<16x32xbf16>
      %c0_53 = arith.constant 0 : index
      %c0_54 = arith.constant 0 : index
      %224 = vector.load %arg5[%c0_53, %c0_54] : memref<32x128xbf16, #tpu.memory_space<vmem>>, vector<32x128xbf16>
      %cst_55 = arith.constant dense<0.000000e+00> : vector<16x128xf32>
      %225 = tpu.matmul %223, %224, %cst_55 {dimension_numbers = #tpu.dot_dimension_numbers<[1], [0], [0], [1], [0, 0, 1, 1], [], []>} : vector<16x32xbf16>, vector<32x128xbf16>, vector<16x128xf32> -> vector<16x128xf32>
      %226 = arith.addf %222, %225 : vector<16x128xf32>
      %227 = vector.extract_strided_slice %226 {offsets = [0, 0], sizes = [16, 96], strides = [1, 1]} : vector<16x128xf32> to vector<16x96xf32>
      %cst_56 = arith.constant 0.000000e+00 : f32
      %228 = vector.broadcast %cst_56 : f32 to vector<16x96xf32>
      %229 = arith.subf %228, %227 : vector<16x96xf32>
      %230 = math.exp %229 : vector<16x96xf32>
      %cst_57 = arith.constant 1.000000e+00 : f32
      %231 = vector.broadcast %cst_57 : f32 to vector<16x96xf32>
      %232 = arith.addf %231, %230 : vector<16x96xf32>
      %233 = tpu.reciprocal %232 {approx = true} : vector<16x96xf32> -> vector<16x96xf32>
      %234 = vector.extract_strided_slice %233 {offsets = [0, 0], sizes = [16, 32], strides = [1, 1]} : vector<16x96xf32> to vector<16x32xf32>
      %235 = vector.extract_strided_slice %233 {offsets = [0, 32], sizes = [16, 32], strides = [1, 1]} : vector<16x96xf32> to vector<16x32xf32>
      %236 = vector.extract_strided_slice %233 {offsets = [0, 64], sizes = [16, 32], strides = [1, 1]} : vector<16x96xf32> to vector<16x32xf32>
      %237 = vector.extract_strided_slice %226 {offsets = [0, 96], sizes = [16, 32], strides = [1, 1]} : vector<16x128xf32> to vector<16x32xf32>
      %238 = math.tanh %237 : vector<16x32xf32>
      %239 = arith.mulf %235, %218 : vector<16x32xf32>
      %240 = arith.mulf %234, %238 : vector<16x32xf32>
      %241 = arith.addf %239, %240 : vector<16x32xf32>
      %242 = math.tanh %241 : vector<16x32xf32>
      %243 = arith.mulf %236, %242 : vector<16x32xf32>
      %244 = arith.addi %3, %c6_i32 : i32
      %245 = vector.broadcast %244 : i32 to vector<16x1xi32>
      %246 = arith.cmpi slt, %245, %12 : vector<16x1xi32>
      %247 = vector.shape_cast %246 : vector<16x1xi1> to vector<16x1xi1>
      %248 = vector.broadcast %247 : vector<16x1xi1> to vector<16x32xi1>
      %249 = arith.select %248, %243, %215 : vector<16x32xi1>, vector<16x32xf32>
      %250 = vector.shape_cast %246 : vector<16x1xi1> to vector<16x1xi1>
      %251 = vector.broadcast %250 : vector<16x1xi1> to vector<16x32xi1>
      %252 = arith.select %251, %241, %218 : vector<16x32xi1>, vector<16x32xf32>
      %c7_i32 = arith.constant 7 : i32
      %253 = arith.index_cast %c7_i32 : i32 to index
      %c0_58 = arith.constant 0 : index
      %c0_59 = arith.constant 0 : index
      %254 = vector.load %arg3[%253, %c0_58, %c0_59] : memref<8x16x128xbf16, #tpu.memory_space<vmem>>, vector<1x16x128xbf16>
      %255 = vector.shape_cast %254 : vector<1x16x128xbf16> to vector<16x128xbf16>
      %256 = arith.extf %255 : vector<16x128xbf16> to vector<16x128xf32>
      %257 = arith.truncf %249 : vector<16x32xf32> to vector<16x32xbf16>
      %c0_60 = arith.constant 0 : index
      %c0_61 = arith.constant 0 : index
      %258 = vector.load %arg5[%c0_60, %c0_61] : memref<32x128xbf16, #tpu.memory_space<vmem>>, vector<32x128xbf16>
      %cst_62 = arith.constant dense<0.000000e+00> : vector<16x128xf32>
      %259 = tpu.matmul %257, %258, %cst_62 {dimension_numbers = #tpu.dot_dimension_numbers<[1], [0], [0], [1], [0, 0, 1, 1], [], []>} : vector<16x32xbf16>, vector<32x128xbf16>, vector<16x128xf32> -> vector<16x128xf32>
      %260 = arith.addf %256, %259 : vector<16x128xf32>
      %261 = vector.extract_strided_slice %260 {offsets = [0, 0], sizes = [16, 96], strides = [1, 1]} : vector<16x128xf32> to vector<16x96xf32>
      %cst_63 = arith.constant 0.000000e+00 : f32
      %262 = vector.broadcast %cst_63 : f32 to vector<16x96xf32>
      %263 = arith.subf %262, %261 : vector<16x96xf32>
      %264 = math.exp %263 : vector<16x96xf32>
      %cst_64 = arith.constant 1.000000e+00 : f32
      %265 = vector.broadcast %cst_64 : f32 to vector<16x96xf32>
      %266 = arith.addf %265, %264 : vector<16x96xf32>
      %267 = tpu.reciprocal %266 {approx = true} : vector<16x96xf32> -> vector<16x96xf32>
      %268 = vector.extract_strided_slice %267 {offsets = [0, 0], sizes = [16, 32], strides = [1, 1]} : vector<16x96xf32> to vector<16x32xf32>
      %269 = vector.extract_strided_slice %267 {offsets = [0, 32], sizes = [16, 32], strides = [1, 1]} : vector<16x96xf32> to vector<16x32xf32>
      %270 = vector.extract_strided_slice %267 {offsets = [0, 64], sizes = [16, 32], strides = [1, 1]} : vector<16x96xf32> to vector<16x32xf32>
      %271 = vector.extract_strided_slice %260 {offsets = [0, 96], sizes = [16, 32], strides = [1, 1]} : vector<16x128xf32> to vector<16x32xf32>
      %272 = math.tanh %271 : vector<16x32xf32>
      %273 = arith.mulf %269, %252 : vector<16x32xf32>
      %274 = arith.mulf %268, %272 : vector<16x32xf32>
      %275 = arith.addf %273, %274 : vector<16x32xf32>
      %276 = math.tanh %275 : vector<16x32xf32>
      %277 = arith.mulf %270, %276 : vector<16x32xf32>
      %278 = arith.addi %3, %c7_i32 : i32
      %279 = vector.broadcast %278 : i32 to vector<16x1xi32>
      %280 = arith.cmpi slt, %279, %12 : vector<16x1xi32>
      %281 = vector.shape_cast %280 : vector<16x1xi1> to vector<16x1xi1>
      %282 = vector.broadcast %281 : vector<16x1xi1> to vector<16x32xi1>
      %283 = arith.select %282, %277, %249 : vector<16x32xi1>, vector<16x32xf32>
      %284 = vector.shape_cast %280 : vector<16x1xi1> to vector<16x1xi1>
      %285 = vector.broadcast %284 : vector<16x1xi1> to vector<16x32xi1>
      %286 = arith.select %285, %275, %252 : vector<16x32xi1>, vector<16x32xf32>
      %c8_i32_65 = arith.constant 8 : i32
      %c0_66 = arith.constant 0 : index
      %c0_67 = arith.constant 0 : index
      %287 = vector.load %arg9[%c0_66, %c0_67] : memref<16x32xf32, #tpu.memory_space<vmem>>, vector<16x32xf32>
      tpu.vector_store %arg9[%c0_66, %c0_67], %283 {strides = array<i32>} : memref<16x32xf32, #tpu.memory_space<vmem>>, vector<16x32xf32>,
      %c0_68 = arith.constant 0 : index
      %c0_69 = arith.constant 0 : index
      %288 = vector.load %arg10[%c0_68, %c0_69] : memref<16x32xf32, #tpu.memory_space<vmem>>, vector<16x32xf32>
      tpu.vector_store %arg10[%c0_68, %c0_69], %286 {strides = array<i32>} : memref<16x32xf32, #tpu.memory_space<vmem>>, vector<16x32xf32>,
    } else {
    }
    %c0_i32_2 = arith.constant 0 : i32
    %9 = arith.cmpi eq, %arg1, %c0_i32_2 : i32
    %10 = arith.extui %9 : i1 to i32
    %c0_i32_3 = arith.constant 0 : i32
    %11 = arith.cmpi ne, %10, %c0_i32_3 : i32
    scf.if %11 {
      %c0 = arith.constant 0 : index
      %c0_4 = arith.constant 0 : index
      %12 = vector.load %arg9[%c0, %c0_4] : memref<16x32xf32, #tpu.memory_space<vmem>>, vector<16x32xf32>
      %c0_5 = arith.constant 0 : index
      %c0_6 = arith.constant 0 : index
      %13 = vector.load %arg6[%c0_5, %c0_6] : memref<32x128xf32, #tpu.memory_space<vmem>>, vector<32x128xf32>
      %cst = arith.constant dense<0.000000e+00> : vector<16x128xf32>
      %14 = tpu.matmul %12, %13, %cst {dimension_numbers = #tpu.dot_dimension_numbers<[1], [0], [0], [1], [0, 0, 1, 1], [], []>} : vector<16x32xf32>, vector<32x128xf32>, vector<16x128xf32> -> vector<16x128xf32>
      %c0_7 = arith.constant 0 : index
      %c0_8 = arith.constant 0 : index
      %15 = vector.load %arg7[%c0_7, %c0_8] : memref<1x128xf32, #tpu.memory_space<vmem>>, vector<1x128xf32>
      %16 = vector.broadcast %15 : vector<1x128xf32> to vector<16x128xf32>
      %17 = arith.addf %14, %16 : vector<16x128xf32>
      %c0_9 = arith.constant 0 : index
      %c0_10 = arith.constant 0 : index
      %18 = vector.load %arg8[%c0_9, %c0_10] : memref<16x128xf32, #tpu.memory_space<vmem>>, vector<16x128xf32>
      tpu.vector_store %arg8[%c0_9, %c0_10], %17 {strides = array<i32>} : memref<16x128xf32, #tpu.memory_space<vmem>>, vector<16x128xf32>,
    } else {
    }
    return
  }
  func.func @transform_0(%arg0: i32, %arg1: i32, %arg2: memref<1xi32, #tpu.memory_space<smem>>) -> (i32, i32, i32) {
    %c0_i32 = arith.constant 0 : i32
    %c0_i32_0 = arith.constant 0 : i32
    return %arg1, %arg0, %c0_i32 : i32, i32, i32
  }
  func.func @transform_1(%arg0: i32, %arg1: i32, %arg2: memref<1xi32, #tpu.memory_space<smem>>) -> (i32, i32) {
    %c0_i32 = arith.constant 0 : i32
    %c0_i32_0 = arith.constant 0 : i32
    return %arg0, %c0_i32 : i32, i32
  }
  func.func @transform_2(%arg0: i32, %arg1: i32, %arg2: memref<1xi32, #tpu.memory_space<smem>>) -> (i32, i32) {
    %c0_i32 = arith.constant 0 : i32
    %c0_i32_0 = arith.constant 0 : i32
    %c0_i32_1 = arith.constant 0 : i32
    return %c0_i32, %c0_i32_0 : i32, i32
  }
  func.func @transform_3(%arg0: i32, %arg1: i32, %arg2: memref<1xi32, #tpu.memory_space<smem>>) -> (i32, i32) {
    %c0_i32 = arith.constant 0 : i32
    %c0_i32_0 = arith.constant 0 : i32
    %c0_i32_1 = arith.constant 0 : i32
    return %c0_i32, %c0_i32_0 : i32, i32
  }
  func.func @transform_4(%arg0: i32, %arg1: i32, %arg2: memref<1xi32, #tpu.memory_space<smem>>) -> (i32, i32) {
    %c0_i32 = arith.constant 0 : i32
    %c0_i32_0 = arith.constant 0 : i32
    %c0_i32_1 = arith.constant 0 : i32
    return %c0_i32, %c0_i32_0 : i32, i32
  }
  func.func @transform_5(%arg0: i32, %arg1: i32, %arg2: memref<1xi32, #tpu.memory_space<smem>>) -> (i32, i32) {
    %c0_i32 = arith.constant 0 : i32
    %c0_i32_0 = arith.constant 0 : i32
    return %arg0, %c0_i32 : i32, i32
  }
}

</mosaic_0001>

<llo_original>
// kernel: tpu_custom_call.1
$region0: #{tpu_custom_call.1}
  #allocation0 [shape = 'u32[]', space=smem, size = 0x4, offset = 0x4, fixed_abs, tag = 'smem constant byte address 0x4 - core index']
  #allocation1 [shape = 'u32[144,128]{1,0:T(1,128)}', space=vmem, size = 0x12000, scoped, tag = 'internal scratch']
  #allocation2 [shape = 'f32[16,32]{1,0:T(8,128)}', space=vmem, size = 0x2000, scoped, tag = 'scratch operand']
  #allocation3 [shape = 'f32[16,32]{1,0:T(8,128)}', space=vmem, size = 0x2000, scoped, tag = 'scratch operand']
  #allocation4 [shape = 's32[1]{0}', space=sflag, size = 0x4, scoped, tag = 'scoped memory for tpu_custom_call.1']
  #allocation5 [shape = 's32[1]{0:T(128)S(6)}', space=smem, size = 0x200, scoped, tag = 'prefetched SMEM operand 0']
  %s0 = inlined_call_operand.<no memory space> [shape: s32[1], index: 0, kind: input, shape index: {}]
  %s1 = inlined_call_operand.hbm [shape: bf16[8,16,128], index: 1, kind: input, shape index: {}]
  %s2 = inlined_call_operand.vmem [shape: s32[16,1], index: 2, kind: input, shape index: {}]
  %s3 = inlined_call_operand.hbm [shape: bf16[32,128], index: 3, kind: input, shape index: {}]
  %s4 = inlined_call_operand.vmem [shape: f32[32,128], index: 4, kind: input, shape index: {}]
  %s5 = inlined_call_operand.vmem [shape: f32[1,128], index: 5, kind: input, shape index: {}]
  %s6 = inlined_call_operand.hbm [shape: f32[16,128], index: 6, kind: output, shape index: {}]
  %s7 = sld [smem:[#allocation0]]
  $region50: #{tpu_custom_call.1} parent=0
    _
  %s9 = ssub.s32 1, %s7
  %s10 = scalar_select 0, %s9, %s7
  %11 = sst [smem:[#allocation5]] %s0
  $region1: #{tpu_custom_call.1} parent=0
    #allocation6 [shape = 'u8[32768]{0}', space=vmem, size = 0x8000, scoped, tag = 'input window, operand 1, single buffered']
    #allocation7 [shape = 's32[1]{0}', space=sflag, size = 0x4, scoped, tag = 'scoped memory for tpu_custom_call.1']
    #allocation8 [shape = 's32[1]{0}', space=sflag, size = 0x4, scoped, tag = 'scoped memory for tpu_custom_call.1']
    #allocation9 [shape = 'u8[8192]{0}', space=vmem, size = 0x2000, scoped, tag = 'input window, operand 3, single buffered']
    #allocation10 [shape = 's32[1]{0}', space=sflag, size = 0x4, scoped, tag = 'scoped memory for tpu_custom_call.1']
    #allocation11 [shape = 'u8[8192]{0}', space=vmem, size = 0x2000, scoped, tag = 'output window, operand 0, single buffered']
    %12 = vsyncpa [#allocation7], 0
    %13 = vsyncpa [#allocation10], 0
    %14 = vsyncpa [#allocation8], 0
    // Predicated region
    $region2: #{tpu_custom_call.1} parent=1 // pred_check
      _
    $region3: #{tpu_custom_call.1} parent=1 // pred_check_branch
      %16 = sbr.rel (0) target = $region5
    $region4: #{tpu_custom_call.1} parent=1 // pred_region
      %s18 = ssub.s32 1024, 1024
      %19 = vsyncadd [#allocation7], %s18
      %s20 = sshll.u32 [#allocation6], 4
      %s21 = int_to_ptr.vmem [resolvable:$true] %s20
      %26 = dma.hbm_to_vmem [thread:$0]  %s1, 1024, %s21, [#allocation7], 64, 64, 4
    $region5: #{tpu_custom_call.1} parent=1 // pred_fallthru
      _
    // Predicated region
    $region6: #{tpu_custom_call.1} parent=1 // pred_check
      _
    $region7: #{tpu_custom_call.1} parent=1 // pred_check_branch
      %28 = sbr.rel (0) target = $region9
    $region8: #{tpu_custom_call.1} parent=1 // pred_region
      _
    $region9: #{tpu_custom_call.1} parent=1 // pred_fallthru
      _
    // Predicated region
    $region10: #{tpu_custom_call.1} parent=1 // pred_check
      _
    $region11: #{tpu_custom_call.1} parent=1 // pred_check_branch
      %30 = sbr.rel (0) target = $region13
    $region12: #{tpu_custom_call.1} parent=1 // pred_region
      %s32 = ssub.s32 256, 256
      %33 = vsyncadd [#allocation10], %s32
      %s34 = sshll.u32 [#allocation9], 4
      %s35 = int_to_ptr.vmem [resolvable:$true] %s34
      %40 = dma.hbm_to_vmem [thread:$0]  %s3, 256, %s35, [#allocation10], 64, 64, 4
    $region13: #{tpu_custom_call.1} parent=1 // pred_fallthru
      _
    // Predicated region
    $region14: #{tpu_custom_call.1} parent=1 // pred_check
      _
    $region15: #{tpu_custom_call.1} parent=1 // pred_check_branch
      %42 = sbr.rel (0) target = $region17
    $region16: #{tpu_custom_call.1} parent=1 // pred_region
      _
    $region17: #{tpu_custom_call.1} parent=1 // pred_fallthru
      _
    // Predicated region
    $region18: #{tpu_custom_call.1} parent=1 // pred_check
      _
    $region19: #{tpu_custom_call.1} parent=1 // pred_check_branch
      %44 = sbr.rel (0) target = $region21
    $region20: #{tpu_custom_call.1} parent=1 // pred_region
      _
    $region21: #{tpu_custom_call.1} parent=1 // pred_fallthru
      _
    // Predicated region
    $region22: #{tpu_custom_call.1} parent=1 // pred_check
      _
    $region23: #{tpu_custom_call.1} parent=1 // pred_check_branch
      %46 = sbr.rel (0) target = $region25
    $region24: #{tpu_custom_call.1} parent=1 // pred_region
      %47 = dma.done [#allocation7], 1024
    $region25: #{tpu_custom_call.1} parent=1 // pred_fallthru
      _
    // Predicated region
    $region26: #{tpu_custom_call.1} parent=1 // pred_check
      _
    $region27: #{tpu_custom_call.1} parent=1 // pred_check_branch
      %49 = sbr.rel (0) target = $region29
    $region28: #{tpu_custom_call.1} parent=1 // pred_region
      %50 = dma.done [#allocation10], 256
    $region29: #{tpu_custom_call.1} parent=1 // pred_fallthru
      _
    %p52 = scmp.eq.s32.totalorder 0, 0
    // Predicated region
    $region30: #{tpu_custom_call.1} parent=1 // pred_check
      %p53 = pneg %p52
    $region31: #{tpu_custom_call.1} parent=1 // pred_check_branch
      %55 = sbr.rel (%p53) target = $region33
    $region32: #{tpu_custom_call.1} parent=1 // pred_region
      %vm56 = vcmask 261120
      %57 = vst.msk [vmem:[#allocation2] sm:$0xff] %vm56, 0.0
      %58 = vst.msk [vmem:[#allocation2 + $0x8] sm:$0xff] %vm56, 0.0
      %59 = vst.msk [vmem:[#allocation3] sm:$0xff] %vm56, 0.0
      %60 = vst.msk [vmem:[#allocation3 + $0x8] sm:$0xff] %vm56, 0.0
    $region33: #{tpu_custom_call.1} parent=1 // pred_fallthru
      _
    %s61 = smul.u32 0, 8
    %s62 = sld [smem:[#allocation5]]
    %p63 = scmp.lt.s32.totalorder %s61, %s62
    // Predicated region
    $region34: #{tpu_custom_call.1} parent=1 // pred_check
      %p64 = pneg %p63
    $region35: #{tpu_custom_call.1} parent=1 // pred_check_branch
      %66 = sbr.rel (%p64) target = $region37
    $region36: #{tpu_custom_call.1} parent=1 // pred_region
      %v67 = vld [vmem:[%s2] sm:$0xff]
      %v68 = vld [vmem:[%s2 + $0x8] sm:$0xff]
      %v69 = vld [vmem:[#allocation2] sm:$0xff]
      %v70 = vld [vmem:[#allocation2 + $0x8] sm:$0xff]
      %v71 = vld [vmem:[#allocation3] sm:$0xff]
      %v72 = vld [vmem:[#allocation3 + $0x8] sm:$0xff]
      %v73 = vld [vmem:[#allocation6] sm:$0xf]
      %v74 = vld [vmem:[#allocation6 + $0x4] sm:$0xf]
      %v75 = vunpack.c.l.bf16 %v73
      %v76 = vunpack.c.l.bf16 %v74
      %v77 = vpack.c.bf16 %v70, %v69
      %v78 = vld [vmem:[#allocation9] sm:$0xf]
      %v79 = vld [vmem:[#allocation9 + $0x4] sm:$0xf]
      %v80 = vld [vmem:[#allocation9 + $0x8] sm:$0xf]
      %v81 = vld [vmem:[#allocation9 + $0xc] sm:$0xf]
      %v86 = vunpack.c.l.b16 %v78
      %v87 = vunpack.c.l.b16 %v79
      %v88 = vunpack.c.l.b16 %v80
      %v89 = vunpack.c.l.b16 %v81
      %v90 = vpack.c.b16 %v87, %v86
      %v91 = vpack.c.b16 %v89, %v88
      %vm94 = vcmask 261120
      %v96 = vsel %vm94, %v77, 0
      %98 = vmatprep.subr.bf16.mxu0 0
      %99 = vmatpush1.bf16.msra.mxu0 %v90
      %100 = vmatprep.subr.bf16.mxu0 0
      %101 = vmatpush1.bf16.msra.mxu0 %v91
      %102 = vmatprep.subr.bf16.mxu0 0
      %103 = vmatpush1.bf16.msra.mxu0 0
      %104 = vmatprep.subr.bf16.mxu0 0
      %105 = vmatpush1.bf16.msra.mxu0 0
      %106 = vmatprep.subr.bf16.mxu0 0
      %107 = vmatpush1.bf16.msra.mxu0 0
      %108 = vmatprep.subr.bf16.mxu0 0
      %109 = vmatpush1.bf16.msra.mxu0 0
      %110 = vmatprep.subr.bf16.mxu0 0
      %111 = vmatpush1.bf16.msra.mxu0 0
      %112 = vmatprep.subr.bf16.mxu0 0
      %113 = vmatpush1.bf16.msra.mxu0 0
      %114 = vmatprep.subr.bf16.mxu0 0
      %115 = vmatpush1.bf16.msra.mxu0 0
      %116 = vmatprep.subr.bf16.mxu0 0
      %117 = vmatpush1.bf16.msra.mxu0 0
      %118 = vmatprep.subr.bf16.mxu0 0
      %119 = vmatpush1.bf16.msra.mxu0 0
      %120 = vmatprep.subr.bf16.mxu0 0
      %121 = vmatpush1.bf16.msra.mxu0 0
      %122 = vmatprep.subr.bf16.mxu0 0
      %123 = vmatpush1.bf16.msra.mxu0 0
      %124 = vmatprep.subr.bf16.mxu0 0
      %125 = vmatpush1.bf16.msra.mxu0 0
      %126 = vmatprep.subr.bf16.mxu0 0
      %127 = vmatpush1.bf16.msra.mxu0 0
      %128 = vmatprep.subr.bf16.mxu0 0
      %129 = vmatpush1.bf16.msra.mxu0 0
      %130 = vmatprep.mubr.bf16.mxu0 0
      %131 = vmatmul.mubr.bf16.gmra.mrb[0].mxu0 %v96
      %v132 = vpop.f32.mrb[0].mxu0
      %v133 = vadd.f32 0.0, %v132
      %v134 = vpop.f32.mrb[0].mxu0
      %v135 = vpop.f32.mrb[0].mxu0
      %v136 = vadd.f32 0.0, %v135
      %v137 = vpop.f32.mrb[0].mxu0
      %138 = vdwg.mxu0
      %v139 = vadd.f32 %v75, %v133
      %v140 = vadd.f32 %v76, %v136
      %v141 = vsub.f32 0.0, %v139
      %v142 = vsub.f32 0.0, %v140
      %v143 = vmul.f32 %v141, 1.442695
      %v144 = vpow.pop %v143
      %v145 = vmul.f32 %v142, 1.442695
      %v146 = vpow.pop %v145
      %v147 = vadd.f32 %v144, 1.0
      %v148 = vadd.f32 %v146, 1.0
      %v149 = vrcp.pop %v147
      %v150 = vrcp.pop %v148
      %v151 = vtanh.pop %v139
      %v152 = vtanh.pop %v140
      %155 = vrot.lane.b32.xlu0 %v71, 32
      %v156 = vpop.permute.xlu0 %155
      %157 = vrot.lane.b32.xlu0 %v72, 32
      %v158 = vpop.permute.xlu0 %157
      %v161 = vmul.f32 %v149, %v156
      %v162 = vmul.f32 %v150, %v158
      %165 = vrot.lane.b32.xlu0 %v151, 32
      %v166 = vpop.permute.xlu0 %165
      %167 = vrot.lane.b32.xlu0 %v152, 32
      %v168 = vpop.permute.xlu0 %167
      %v171 = vmul.f32 %v149, %v166
      %v172 = vmul.f32 %v150, %v168
      %175 = vrot.lane.b32.xlu0 %v171, 32
      %v176 = vpop.permute.xlu0 %175
      %177 = vrot.lane.b32.xlu0 %v172, 32
      %v178 = vpop.permute.xlu0 %177
      %v181 = vadd.f32 %v161, %v176
      %v182 = vadd.f32 %v162, %v178
      %v183 = vtanh.pop %v181
      %v184 = vtanh.pop %v182
      %187 = vrot.lane.b32.xlu0 %v183, 32
      %v188 = vpop.permute.xlu0 %187
      %189 = vrot.lane.b32.xlu0 %v184, 32
      %v190 = vpop.permute.xlu0 %189
      %v193 = vmul.f32 %v149, %v188
      %v194 = vmul.f32 %v150, %v190
      %v195 = vstv %s61
      %vm196 = vcmp.lt.s32.totalorder %v195, %v67
      %vm197 = vcmp.lt.s32.totalorder %v195, %v68
      %v198 = vsel %vm196, 1, 0
      %v199 = vsel %vm197, 1, 0
      %200 = vset.pattern.permute.xlu0 0
      %201 = vperm.xlu0 %200, %v198
      %v202 = vpop.permute.xlu0 %201
      %203 = vset.pattern.permute.xlu0 0
      %204 = vperm.xlu0 %203, %v199
      %v205 = vpop.permute.xlu0 %204
      %vm206 = vcmp.eq.s32.totalorder %v202, 1
      %vm207 = vcmp.eq.s32.totalorder %v205, 1
      %210 = vrot.lane.b32.xlu0 %v69, 64
      %v211 = vpop.permute.xlu0 %210
      %212 = vrot.lane.b32.xlu0 %v70, 64
      %v213 = vpop.permute.xlu0 %212
      %v216 = vsel %vm206, %v193, %v211
      %v217 = vsel %vm207, %v194, %v213
      %v218 = vsel %vm206, %v181, %v156
      %v219 = vsel %vm207, %v182, %v158
      %s220 = scalar_lea.vmem [#allocation6], 8
      %v221 = vld [vmem:[%s220] sm:$0xf]
      %v222 = vld [vmem:[%s220 + $0x4] sm:$0xf]
      %v223 = vunpack.c.l.bf16 %v221
      %v224 = vunpack.c.l.bf16 %v222
      %v225 = vpack.c.bf16 %v217, %v216
      %227 = vrot.lane.b32.xlu0 %v225, 64
      %v228 = vpop.permute.xlu0 %227
      %v230 = vsel %vm94, %v228, 0
      %232 = vmatprep.subr.bf16.mxu0 0
      %233 = vmatpush1.bf16.msra.mxu0 %v90
      %234 = vmatprep.subr.bf16.mxu0 0
      %235 = vmatpush1.bf16.msra.mxu0 %v91
      %236 = vmatprep.subr.bf16.mxu0 0
      %237 = vmatpush1.bf16.msra.mxu0 0
      %238 = vmatprep.subr.bf16.mxu0 0
      %239 = vmatpush1.bf16.msra.mxu0 0
      %240 = vmatprep.subr.bf16.mxu0 0
      %241 = vmatpush1.bf16.msra.mxu0 0
      %242 = vmatprep.subr.bf16.mxu0 0
      %243 = vmatpush1.bf16.msra.mxu0 0
      %244 = vmatprep.subr.bf16.mxu0 0
      %245 = vmatpush1.bf16.msra.mxu0 0
      %246 = vmatprep.subr.bf16.mxu0 0
      %247 = vmatpush1.bf16.msra.mxu0 0
      %248 = vmatprep.subr.bf16.mxu0 0
      %249 = vmatpush1.bf16.msra.mxu0 0
      %250 = vmatprep.subr.bf16.mxu0 0
      %251 = vmatpush1.bf16.msra.mxu0 0
      %252 = vmatprep.subr.bf16.mxu0 0
      %253 = vmatpush1.bf16.msra.mxu0 0
      %254 = vmatprep.subr.bf16.mxu0 0
      %255 = vmatpush1.bf16.msra.mxu0 0
      %256 = vmatprep.subr.bf16.mxu0 0
      %257 = vmatpush1.bf16.msra.mxu0 0
      %258 = vmatprep.subr.bf16.mxu0 0
      %259 = vmatpush1.bf16.msra.mxu0 0
      %260 = vmatprep.subr.bf16.mxu0 0
      %261 = vmatpush1.bf16.msra.mxu0 0
      %262 = vmatprep.subr.bf16.mxu0 0
      %263 = vmatpush1.bf16.msra.mxu0 0
      %264 = vmatprep.mubr.bf16.mxu0 0
      %265 = vmatmul.mubr.bf16.gmra.mrb[0].mxu0 %v230
      %v266 = vpop.f32.mrb[0].mxu0
      %v267 = vadd.f32 0.0, %v266
      %v268 = vpop.f32.mrb[0].mxu0
      %v269 = vpop.f32.mrb[0].mxu0
      %v270 = vadd.f32 0.0, %v269
      %v271 = vpop.f32.mrb[0].mxu0
      %272 = vdwg.mxu0
      %v273 = vadd.f32 %v223, %v267
      %v274 = vadd.f32 %v224, %v270
      %v275 = vsub.f32 0.0, %v273
      %v276 = vsub.f32 0.0, %v274
      %v277 = vmul.f32 %v275, 1.442695
      %v278 = vpow.pop %v277
      %v279 = vmul.f32 %v276, 1.442695
      %v280 = vpow.pop %v279
      %v281 = vadd.f32 %v278, 1.0
      %v282 = vadd.f32 %v280, 1.0
      %v283 = vrcp.pop %v281
      %v284 = vrcp.pop %v282
      %v285 = vtanh.pop %v273
      %v286 = vtanh.pop %v274
      %v287 = vmul.f32 %v283, %v218
      %v288 = vmul.f32 %v284, %v219
      %291 = vrot.lane.b32.xlu0 %v285, 32
      %v292 = vpop.permute.xlu0 %291
      %293 = vrot.lane.b32.xlu0 %v286, 32
      %v294 = vpop.permute.xlu0 %293
      %v297 = vmul.f32 %v283, %v292
      %v298 = vmul.f32 %v284, %v294
      %301 = vrot.lane.b32.xlu0 %v297, 32
      %v302 = vpop.permute.xlu0 %301
      %303 = vrot.lane.b32.xlu0 %v298, 32
      %v304 = vpop.permute.xlu0 %303
      %v307 = vadd.f32 %v287, %v302
      %v308 = vadd.f32 %v288, %v304
      %v309 = vtanh.pop %v307
      %v310 = vtanh.pop %v308
      %313 = vrot.lane.b32.xlu0 %v309, 32
      %v314 = vpop.permute.xlu0 %313
      %315 = vrot.lane.b32.xlu0 %v310, 32
      %v316 = vpop.permute.xlu0 %315
      %v319 = vmul.f32 %v283, %v314
      %v320 = vmul.f32 %v284, %v316
      %s321 = sadd.s32 %s61, 1
      %v322 = vstv %s321
      %vm323 = vcmp.lt.s32.totalorder %v322, %v67
      %vm324 = vcmp.lt.s32.totalorder %v322, %v68
      %v325 = vsel %vm323, 1, 0
      %v326 = vsel %vm324, 1, 0
      %327 = vset.pattern.permute.xlu0 0
      %328 = vperm.xlu0 %327, %v325
      %v329 = vpop.permute.xlu0 %328
      %330 = vset.pattern.permute.xlu0 0
      %331 = vperm.xlu0 %330, %v326
      %v332 = vpop.permute.xlu0 %331
      %vm333 = vcmp.eq.s32.totalorder %v329, 1
      %vm334 = vcmp.eq.s32.totalorder %v332, 1
      %v335 = vsel %vm333, %v319, %v216
      %v336 = vsel %vm334, %v320, %v217
      %v337 = vsel %vm333, %v307, %v218
      %v338 = vsel %vm334, %v308, %v219
      %s339 = scalar_lea.vmem [#allocation6], 16
      %v340 = vld [vmem:[%s339] sm:$0xf]
      %v341 = vld [vmem:[%s339 + $0x4] sm:$0xf]
      %v342 = vunpack.c.l.bf16 %v340
      %v343 = vunpack.c.l.bf16 %v341
      %v344 = vpack.c.bf16 %v336, %v335
      %346 = vrot.lane.b32.xlu0 %v344, 64
      %v347 = vpop.permute.xlu0 %346
      %v349 = vsel %vm94, %v347, 0
      %351 = vmatprep.subr.bf16.mxu0 0
      %352 = vmatpush1.bf16.msra.mxu0 %v90
      %353 = vmatprep.subr.bf16.mxu0 0
      %354 = vmatpush1.bf16.msra.mxu0 %v91
      %355 = vmatprep.subr.bf16.mxu0 0
      %356 = vmatpush1.bf16.msra.mxu0 0
      %357 = vmatprep.subr.bf16.mxu0 0
      %358 = vmatpush1.bf16.msra.mxu0 0
      %359 = vmatprep.subr.bf16.mxu0 0
      %360 = vmatpush1.bf16.msra.mxu0 0
      %361 = vmatprep.subr.bf16.mxu0 0
      %362 = vmatpush1.bf16.msra.mxu0 0
      %363 = vmatprep.subr.bf16.mxu0 0
      %364 = vmatpush1.bf16.msra.mxu0 0
      %365 = vmatprep.subr.bf16.mxu0 0
      %366 = vmatpush1.bf16.msra.mxu0 0
      %367 = vmatprep.subr.bf16.mxu0 0
      %368 = vmatpush1.bf16.msra.mxu0 0
      %369 = vmatprep.subr.bf16.mxu0 0
      %370 = vmatpush1.bf16.msra.mxu0 0
      %371 = vmatprep.subr.bf16.mxu0 0
      %372 = vmatpush1.bf16.msra.mxu0 0
      %373 = vmatprep.subr.bf16.mxu0 0
      %374 = vmatpush1.bf16.msra.mxu0 0
      %375 = vmatprep.subr.bf16.mxu0 0
      %376 = vmatpush1.bf16.msra.mxu0 0
      %377 = vmatprep.subr.bf16.mxu0 0
      %378 = vmatpush1.bf16.msra.mxu0 0
      %379 = vmatprep.subr.bf16.mxu0 0
      %380 = vmatpush1.bf16.msra.mxu0 0
      %381 = vmatprep.subr.bf16.mxu0 0
      %382 = vmatpush1.bf16.msra.mxu0 0
      %383 = vmatprep.mubr.bf16.mxu0 0
      %384 = vmatmul.mubr.bf16.gmra.mrb[0].mxu0 %v349
      %v385 = vpop.f32.mrb[0].mxu0
      %v386 = vadd.f32 0.0, %v385
      %v387 = vpop.f32.mrb[0].mxu0
      %v388 = vpop.f32.mrb[0].mxu0
      %v389 = vadd.f32 0.0, %v388
      %v390 = vpop.f32.mrb[0].mxu0
      %391 = vdwg.mxu0
      %v392 = vadd.f32 %v342, %v386
      %v393 = vadd.f32 %v343, %v389
      %v394 = vsub.f32 0.0, %v392
      %v395 = vsub.f32 0.0, %v393
      %v396 = vmul.f32 %v394, 1.442695
      %v397 = vpow.pop %v396
      %v398 = vmul.f32 %v395, 1.442695
      %v399 = vpow.pop %v398
      %v400 = vadd.f32 %v397, 1.0
      %v401 = vadd.f32 %v399, 1.0
      %v402 = vrcp.pop %v400
      %v403 = vrcp.pop %v401
      %v404 = vtanh.pop %v392
      %v405 = vtanh.pop %v393
      %v406 = vmul.f32 %v402, %v337
      %v407 = vmul.f32 %v403, %v338
      %410 = vrot.lane.b32.xlu0 %v404, 32
      %v411 = vpop.permute.xlu0 %410
      %412 = vrot.lane.b32.xlu0 %v405, 32
      %v413 = vpop.permute.xlu0 %412
      %v416 = vmul.f32 %v402, %v411
      %v417 = vmul.f32 %v403, %v413
      %420 = vrot.lane.b32.xlu0 %v416, 32
      %v421 = vpop.permute.xlu0 %420
      %422 = vrot.lane.b32.xlu0 %v417, 32
      %v423 = vpop.permute.xlu0 %422
      %v426 = vadd.f32 %v406, %v421
      %v427 = vadd.f32 %v407, %v423
      %v428 = vtanh.pop %v426
      %v429 = vtanh.pop %v427
      %432 = vrot.lane.b32.xlu0 %v428, 32
      %v433 = vpop.permute.xlu0 %432
      %434 = vrot.lane.b32.xlu0 %v429, 32
      %v435 = vpop.permute.xlu0 %434
      %v438 = vmul.f32 %v402, %v433
      %v439 = vmul.f32 %v403, %v435
      %s440 = sadd.s32 %s61, 2
      %v441 = vstv %s440
      %vm442 = vcmp.lt.s32.totalorder %v441, %v67
      %vm443 = vcmp.lt.s32.totalorder %v441, %v68
      %v444 = vsel %vm442, 1, 0
      %v445 = vsel %vm443, 1, 0
      %446 = vset.pattern.permute.xlu0 0
      %447 = vperm.xlu0 %446, %v444
      %v448 = vpop.permute.xlu0 %447
      %449 = vset.pattern.permute.xlu0 0
      %450 = vperm.xlu0 %449, %v445
      %v451 = vpop.permute.xlu0 %450
      %vm452 = vcmp.eq.s32.totalorder %v448, 1
      %vm453 = vcmp.eq.s32.totalorder %v451, 1
      %v454 = vsel %vm452, %v438, %v335
      %v455 = vsel %vm453, %v439, %v336
      %v456 = vsel %vm452, %v426, %v337
      %v457 = vsel %vm453, %v427, %v338
      %s458 = scalar_lea.vmem [#allocation6], 24
      %v459 = vld [vmem:[%s458] sm:$0xf]
      %v460 = vld [vmem:[%s458 + $0x4] sm:$0xf]
      %v461 = vunpack.c.l.bf16 %v459
      %v462 = vunpack.c.l.bf16 %v460
      %v463 = vpack.c.bf16 %v455, %v454
      %465 = vrot.lane.b32.xlu0 %v463, 64
      %v466 = vpop.permute.xlu0 %465
      %v468 = vsel %vm94, %v466, 0
      %470 = vmatprep.subr.bf16.mxu0 0
      %471 = vmatpush1.bf16.msra.mxu0 %v90
      %472 = vmatprep.subr.bf16.mxu0 0
      %473 = vmatpush1.bf16.msra.mxu0 %v91
      %474 = vmatprep.subr.bf16.mxu0 0
      %475 = vmatpush1.bf16.msra.mxu0 0
      %476 = vmatprep.subr.bf16.mxu0 0
      %477 = vmatpush1.bf16.msra.mxu0 0
      %478 = vmatprep.subr.bf16.mxu0 0
      %479 = vmatpush1.bf16.msra.mxu0 0
      %480 = vmatprep.subr.bf16.mxu0 0
      %481 = vmatpush1.bf16.msra.mxu0 0
      %482 = vmatprep.subr.bf16.mxu0 0
      %483 = vmatpush1.bf16.msra.mxu0 0
      %484 = vmatprep.subr.bf16.mxu0 0
      %485 = vmatpush1.bf16.msra.mxu0 0
      %486 = vmatprep.subr.bf16.mxu0 0
      %487 = vmatpush1.bf16.msra.mxu0 0
      %488 = vmatprep.subr.bf16.mxu0 0
      %489 = vmatpush1.bf16.msra.mxu0 0
      %490 = vmatprep.subr.bf16.mxu0 0
      %491 = vmatpush1.bf16.msra.mxu0 0
      %492 = vmatprep.subr.bf16.mxu0 0
      %493 = vmatpush1.bf16.msra.mxu0 0
      %494 = vmatprep.subr.bf16.mxu0 0
      %495 = vmatpush1.bf16.msra.mxu0 0
      %496 = vmatprep.subr.bf16.mxu0 0
      %497 = vmatpush1.bf16.msra.mxu0 0
      %498 = vmatprep.subr.bf16.mxu0 0
      %499 = vmatpush1.bf16.msra.mxu0 0
      %500 = vmatprep.subr.bf16.mxu0 0
      %501 = vmatpush1.bf16.msra.mxu0 0
      %502 = vmatprep.mubr.bf16.mxu0 0
      %503 = vmatmul.mubr.bf16.gmra.mrb[0].mxu0 %v468
      %v504 = vpop.f32.mrb[0].mxu0
      %v505 = vadd.f32 0.0, %v504
      %v506 = vpop.f32.mrb[0].mxu0
      %v507 = vpop.f32.mrb[0].mxu0
      %v508 = vadd.f32 0.0, %v507
      %v509 = vpop.f32.mrb[0].mxu0
      %510 = vdwg.mxu0
      %v511 = vadd.f32 %v461, %v505
      %v512 = vadd.f32 %v462, %v508
      %v513 = vsub.f32 0.0, %v511
      %v514 = vsub.f32 0.0, %v512
      %v515 = vmul.f32 %v513, 1.442695
      %v516 = vpow.pop %v515
      %v517 = vmul.f32 %v514, 1.442695
      %v518 = vpow.pop %v517
      %v519 = vadd.f32 %v516, 1.0
      %v520 = vadd.f32 %v518, 1.0
      %v521 = vrcp.pop %v519
      %v522 = vrcp.pop %v520
      %v523 = vtanh.pop %v511
      %v524 = vtanh.pop %v512
      %v525 = vmul.f32 %v521, %v456
      %v526 = vmul.f32 %v522, %v457
      %529 = vrot.lane.b32.xlu0 %v523, 32
      %v530 = vpop.permute.xlu0 %529
      %531 = vrot.lane.b32.xlu0 %v524, 32
      %v532 = vpop.permute.xlu0 %531
      %v535 = vmul.f32 %v521, %v530
      %v536 = vmul.f32 %v522, %v532
      %539 = vrot.lane.b32.xlu0 %v535, 32
      %v540 = vpop.permute.xlu0 %539
      %541 = vrot.lane.b32.xlu0 %v536, 32
      %v542 = vpop.permute.xlu0 %541
      %v545 = vadd.f32 %v525, %v540
      %v546 = vadd.f32 %v526, %v542
      %v547 = vtanh.pop %v545
      %v548 = vtanh.pop %v546
      %551 = vrot.lane.b32.xlu0 %v547, 32
      %v552 = vpop.permute.xlu0 %551
      %553 = vrot.lane.b32.xlu0 %v548, 32
      %v554 = vpop.permute.xlu0 %553
      %v557 = vmul.f32 %v521, %v552
      %v558 = vmul.f32 %v522, %v554
      %s559 = sadd.s32 %s61, 3
      %v560 = vstv %s559
      %vm561 = vcmp.lt.s32.totalorder %v560, %v67
      %vm562 = vcmp.lt.s32.totalorder %v560, %v68
      %v563 = vsel %vm561, 1, 0
      %v564 = vsel %vm562, 1, 0
      %565 = vset.pattern.permute.xlu0 0
      %566 = vperm.xlu0 %565, %v563
      %v567 = vpop.permute.xlu0 %566
      %568 = vset.pattern.permute.xlu0 0
      %569 = vperm.xlu0 %568, %v564
      %v570 = vpop.permute.xlu0 %569
      %vm571 = vcmp.eq.s32.totalorder %v567, 1
      %vm572 = vcmp.eq.s32.totalorder %v570, 1
      %v573 = vsel %vm571, %v557, %v454
      %v574 = vsel %vm572, %v558, %v455
      %v575 = vsel %vm571, %v545, %v456
      %v576 = vsel %vm572, %v546, %v457
      %s577 = scalar_lea.vmem [#allocation6], 32
      %v578 = vld [vmem:[%s577] sm:$0xf]
      %v579 = vld [vmem:[%s577 + $0x4] sm:$0xf]
      %v580 = vunpack.c.l.bf16 %v578
      %v581 = vunpack.c.l.bf16 %v579
      %v582 = vpack.c.bf16 %v574, %v573
      %584 = vrot.lane.b32.xlu0 %v582, 64
      %v585 = vpop.permute.xlu0 %584
      %v587 = vsel %vm94, %v585, 0
      %589 = vmatprep.subr.bf16.mxu0 0
      %590 = vmatpush1.bf16.msra.mxu0 %v90
      %591 = vmatprep.subr.bf16.mxu0 0
      %592 = vmatpush1.bf16.msra.mxu0 %v91
      %593 = vmatprep.subr.bf16.mxu0 0
      %594 = vmatpush1.bf16.msra.mxu0 0
      %595 = vmatprep.subr.bf16.mxu0 0
      %596 = vmatpush1.bf16.msra.mxu0 0
      %597 = vmatprep.subr.bf16.mxu0 0
      %598 = vmatpush1.bf16.msra.mxu0 0
      %599 = vmatprep.subr.bf16.mxu0 0
      %600 = vmatpush1.bf16.msra.mxu0 0
      %601 = vmatprep.subr.bf16.mxu0 0
      %602 = vmatpush1.bf16.msra.mxu0 0
      %603 = vmatprep.subr.bf16.mxu0 0
      %604 = vmatpush1.bf16.msra.mxu0 0
      %605 = vmatprep.subr.bf16.mxu0 0
      %606 = vmatpush1.bf16.msra.mxu0 0
      %607 = vmatprep.subr.bf16.mxu0 0
      %608 = vmatpush1.bf16.msra.mxu0 0
      %609 = vmatprep.subr.bf16.mxu0 0
      %610 = vmatpush1.bf16.msra.mxu0 0
      %611 = vmatprep.subr.bf16.mxu0 0
      %612 = vmatpush1.bf16.msra.mxu0 0
      %613 = vmatprep.subr.bf16.mxu0 0
      %614 = vmatpush1.bf16.msra.mxu0 0
      %615 = vmatprep.subr.bf16.mxu0 0
      %616 = vmatpush1.bf16.msra.mxu0 0
      %617 = vmatprep.subr.bf16.mxu0 0
      %618 = vmatpush1.bf16.msra.mxu0 0
      %619 = vmatprep.subr.bf16.mxu0 0
      %620 = vmatpush1.bf16.msra.mxu0 0
      %621 = vmatprep.mubr.bf16.mxu0 0
      %622 = vmatmul.mubr.bf16.gmra.mrb[0].mxu0 %v587
      %v623 = vpop.f32.mrb[0].mxu0
      %v624 = vadd.f32 0.0, %v623
      %v625 = vpop.f32.mrb[0].mxu0
      %v626 = vpop.f32.mrb[0].mxu0
      %v627 = vadd.f32 0.0, %v626
      %v628 = vpop.f32.mrb[0].mxu0
      %629 = vdwg.mxu0
      %v630 = vadd.f32 %v580, %v624
      %v631 = vadd.f32 %v581, %v627
      %v632 = vsub.f32 0.0, %v630
      %v633 = vsub.f32 0.0, %v631
      %v634 = vmul.f32 %v632, 1.442695
      %v635 = vpow.pop %v634
      %v636 = vmul.f32 %v633, 1.442695
      %v637 = vpow.pop %v636
      %v638 = vadd.f32 %v635, 1.0
      %v639 = vadd.f32 %v637, 1.0
      %v640 = vrcp.pop %v638
      %v641 = vrcp.pop %v639
      %v642 = vtanh.pop %v630
      %v643 = vtanh.pop %v631
      %v644 = vmul.f32 %v640, %v575
      %v645 = vmul.f32 %v641, %v576
      %648 = vrot.lane.b32.xlu0 %v642, 32
      %v649 = vpop.permute.xlu0 %648
      %650 = vrot.lane.b32.xlu0 %v643, 32
      %v651 = vpop.permute.xlu0 %650
      %v654 = vmul.f32 %v640, %v649
      %v655 = vmul.f32 %v641, %v651
      %658 = vrot.lane.b32.xlu0 %v654, 32
      %v659 = vpop.permute.xlu0 %658
      %660 = vrot.lane.b32.xlu0 %v655, 32
      %v661 = vpop.permute.xlu0 %660
      %v664 = vadd.f32 %v644, %v659
      %v665 = vadd.f32 %v645, %v661
      %v666 = vtanh.pop %v664
      %v667 = vtanh.pop %v665
      %670 = vrot.lane.b32.xlu0 %v666, 32
      %v671 = vpop.permute.xlu0 %670
      %672 = vrot.lane.b32.xlu0 %v667, 32
      %v673 = vpop.permute.xlu0 %672
      %v676 = vmul.f32 %v640, %v671
      %v677 = vmul.f32 %v641, %v673
      %s678 = sadd.s32 %s61, 4
      %v679 = vstv %s678
      %vm680 = vcmp.lt.s32.totalorder %v679, %v67
      %vm681 = vcmp.lt.s32.totalorder %v679, %v68
      %v682 = vsel %vm680, 1, 0
      %v683 = vsel %vm681, 1, 0
      %684 = vset.pattern.permute.xlu0 0
      %685 = vperm.xlu0 %684, %v682
      %v686 = vpop.permute.xlu0 %685
      %687 = vset.pattern.permute.xlu0 0
      %688 = vperm.xlu0 %687, %v683
      %v689 = vpop.permute.xlu0 %688
      %vm690 = vcmp.eq.s32.totalorder %v686, 1
      %vm691 = vcmp.eq.s32.totalorder %v689, 1
      %v692 = vsel %vm690, %v676, %v573
      %v693 = vsel %vm691, %v677, %v574
      %v694 = vsel %vm690, %v664, %v575
      %v695 = vsel %vm691, %v665, %v576
      %s696 = scalar_lea.vmem [#allocation6], 40
      %v697 = vld [vmem:[%s696] sm:$0xf]
      %v698 = vld [vmem:[%s696 + $0x4] sm:$0xf]
      %v699 = vunpack.c.l.bf16 %v697
      %v700 = vunpack.c.l.bf16 %v698
      %v701 = vpack.c.bf16 %v693, %v692
      %703 = vrot.lane.b32.xlu0 %v701, 64
      %v704 = vpop.permute.xlu0 %703
      %v706 = vsel %vm94, %v704, 0
      %708 = vmatprep.subr.bf16.mxu0 0
      %709 = vmatpush1.bf16.msra.mxu0 %v90
      %710 = vmatprep.subr.bf16.mxu0 0
      %711 = vmatpush1.bf16.msra.mxu0 %v91
      %712 = vmatprep.subr.bf16.mxu0 0
      %713 = vmatpush1.bf16.msra.mxu0 0
      %714 = vmatprep.subr.bf16.mxu0 0
      %715 = vmatpush1.bf16.msra.mxu0 0
      %716 = vmatprep.subr.bf16.mxu0 0
      %717 = vmatpush1.bf16.msra.mxu0 0
      %718 = vmatprep.subr.bf16.mxu0 0
      %719 = vmatpush1.bf16.msra.mxu0 0
      %720 = vmatprep.subr.bf16.mxu0 0
      %721 = vmatpush1.bf16.msra.mxu0 0
      %722 = vmatprep.subr.bf16.mxu0 0
      %723 = vmatpush1.bf16.msra.mxu0 0
      %724 = vmatprep.subr.bf16.mxu0 0
      %725 = vmatpush1.bf16.msra.mxu0 0
      %726 = vmatprep.subr.bf16.mxu0 0
      %727 = vmatpush1.bf16.msra.mxu0 0
      %728 = vmatprep.subr.bf16.mxu0 0
      %729 = vmatpush1.bf16.msra.mxu0 0
      %730 = vmatprep.subr.bf16.mxu0 0
      %731 = vmatpush1.bf16.msra.mxu0 0
      %732 = vmatprep.subr.bf16.mxu0 0
      %733 = vmatpush1.bf16.msra.mxu0 0
      %734 = vmatprep.subr.bf16.mxu0 0
      %735 = vmatpush1.bf16.msra.mxu0 0
      %736 = vmatprep.subr.bf16.mxu0 0
      %737 = vmatpush1.bf16.msra.mxu0 0
      %738 = vmatprep.subr.bf16.mxu0 0
      %739 = vmatpush1.bf16.msra.mxu0 0
      %740 = vmatprep.mubr.bf16.mxu0 0
      %741 = vmatmul.mubr.bf16.gmra.mrb[0].mxu0 %v706
      %v742 = vpop.f32.mrb[0].mxu0
      %v743 = vadd.f32 0.0, %v742
      %v744 = vpop.f32.mrb[0].mxu0
      %v745 = vpop.f32.mrb[0].mxu0
      %v746 = vadd.f32 0.0, %v745
      %v747 = vpop.f32.mrb[0].mxu0
      %748 = vdwg.mxu0
      %v749 = vadd.f32 %v699, %v743
      %v750 = vadd.f32 %v700, %v746
      %v751 = vsub.f32 0.0, %v749
      %v752 = vsub.f32 0.0, %v750
      %v753 = vmul.f32 %v751, 1.442695
      %v754 = vpow.pop %v753
      %v755 = vmul.f32 %v752, 1.442695
      %v756 = vpow.pop %v755
      %v757 = vadd.f32 %v754, 1.0
      %v758 = vadd.f32 %v756, 1.0
      %v759 = vrcp.pop %v757
      %v760 = vrcp.pop %v758
      %v761 = vtanh.pop %v749
      %v762 = vtanh.pop %v750
      %v763 = vmul.f32 %v759, %v694
      %v764 = vmul.f32 %v760, %v695
      %767 = vrot.lane.b32.xlu0 %v761, 32
      %v768 = vpop.permute.xlu0 %767
      %769 = vrot.lane.b32.xlu0 %v762, 32
      %v770 = vpop.permute.xlu0 %769
      %v773 = vmul.f32 %v759, %v768
      %v774 = vmul.f32 %v760, %v770
      %777 = vrot.lane.b32.xlu0 %v773, 32
      %v778 = vpop.permute.xlu0 %777
      %779 = vrot.lane.b32.xlu0 %v774, 32
      %v780 = vpop.permute.xlu0 %779
      %v783 = vadd.f32 %v763, %v778
      %v784 = vadd.f32 %v764, %v780
      %v785 = vtanh.pop %v783
      %v786 = vtanh.pop %v784
      %789 = vrot.lane.b32.xlu0 %v785, 32
      %v790 = vpop.permute.xlu0 %789
      %791 = vrot.lane.b32.xlu0 %v786, 32
      %v792 = vpop.permute.xlu0 %791
      %v795 = vmul.f32 %v759, %v790
      %v796 = vmul.f32 %v760, %v792
      %s797 = sadd.s32 %s61, 5
      %v798 = vstv %s797
      %vm799 = vcmp.lt.s32.totalorder %v798, %v67
      %vm800 = vcmp.lt.s32.totalorder %v798, %v68
      %v801 = vsel %vm799, 1, 0
      %v802 = vsel %vm800, 1, 0
      %803 = vset.pattern.permute.xlu0 0
      %804 = vperm.xlu0 %803, %v801
      %v805 = vpop.permute.xlu0 %804
      %806 = vset.pattern.permute.xlu0 0
      %807 = vperm.xlu0 %806, %v802
      %v808 = vpop.permute.xlu0 %807
      %vm809 = vcmp.eq.s32.totalorder %v805, 1
      %vm810 = vcmp.eq.s32.totalorder %v808, 1
      %v811 = vsel %vm809, %v795, %v692
      %v812 = vsel %vm810, %v796, %v693
      %v813 = vsel %vm809, %v783, %v694
      %v814 = vsel %vm810, %v784, %v695
      %s815 = scalar_lea.vmem [#allocation6], 48
      %v816 = vld [vmem:[%s815] sm:$0xf]
      %v817 = vld [vmem:[%s815 + $0x4] sm:$0xf]
      %v818 = vunpack.c.l.bf16 %v816
      %v819 = vunpack.c.l.bf16 %v817
      %v820 = vpack.c.bf16 %v812, %v811
      %822 = vrot.lane.b32.xlu0 %v820, 64
      %v823 = vpop.permute.xlu0 %822
      %v825 = vsel %vm94, %v823, 0
      %827 = vmatprep.subr.bf16.mxu0 0
      %828 = vmatpush1.bf16.msra.mxu0 %v90
      %829 = vmatprep.subr.bf16.mxu0 0
      %830 = vmatpush1.bf16.msra.mxu0 %v91
      %831 = vmatprep.subr.bf16.mxu0 0
      %832 = vmatpush1.bf16.msra.mxu0 0
      %833 = vmatprep.subr.bf16.mxu0 0
      %834 = vmatpush1.bf16.msra.mxu0 0
      %835 = vmatprep.subr.bf16.mxu0 0
      %836 = vmatpush1.bf16.msra.mxu0 0
      %837 = vmatprep.subr.bf16.mxu0 0
      %838 = vmatpush1.bf16.msra.mxu0 0
      %839 = vmatprep.subr.bf16.mxu0 0
      %840 = vmatpush1.bf16.msra.mxu0 0
      %841 = vmatprep.subr.bf16.mxu0 0
      %842 = vmatpush1.bf16.msra.mxu0 0
      %843 = vmatprep.subr.bf16.mxu0 0
      %844 = vmatpush1.bf16.msra.mxu0 0
      %845 = vmatprep.subr.bf16.mxu0 0
      %846 = vmatpush1.bf16.msra.mxu0 0
      %847 = vmatprep.subr.bf16.mxu0 0
      %848 = vmatpush1.bf16.msra.mxu0 0
      %849 = vmatprep.subr.bf16.mxu0 0
      %850 = vmatpush1.bf16.msra.mxu0 0
      %851 = vmatprep.subr.bf16.mxu0 0
      %852 = vmatpush1.bf16.msra.mxu0 0
      %853 = vmatprep.subr.bf16.mxu0 0
      %854 = vmatpush1.bf16.msra.mxu0 0
      %855 = vmatprep.subr.bf16.mxu0 0
      %856 = vmatpush1.bf16.msra.mxu0 0
      %857 = vmatprep.subr.bf16.mxu0 0
      %858 = vmatpush1.bf16.msra.mxu0 0
      %859 = vmatprep.mubr.bf16.mxu0 0
      %860 = vmatmul.mubr.bf16.gmra.mrb[0].mxu0 %v825
      %v861 = vpop.f32.mrb[0].mxu0
      %v862 = vadd.f32 0.0, %v861
      %v863 = vpop.f32.mrb[0].mxu0
      %v864 = vpop.f32.mrb[0].mxu0
      %v865 = vadd.f32 0.0, %v864
      %v866 = vpop.f32.mrb[0].mxu0
      %867 = vdwg.mxu0
      %v868 = vadd.f32 %v818, %v862
      %v869 = vadd.f32 %v819, %v865
      %v870 = vsub.f32 0.0, %v868
      %v871 = vsub.f32 0.0, %v869
      %v872 = vmul.f32 %v870, 1.442695
      %v873 = vpow.pop %v872
      %v874 = vmul.f32 %v871, 1.442695
      %v875 = vpow.pop %v874
      %v876 = vadd.f32 %v873, 1.0
      %v877 = vadd.f32 %v875, 1.0
      %v878 = vrcp.pop %v876
      %v879 = vrcp.pop %v877
      %v880 = vtanh.pop %v868
      %v881 = vtanh.pop %v869
      %v882 = vmul.f32 %v878, %v813
      %v883 = vmul.f32 %v879, %v814
      %886 = vrot.lane.b32.xlu0 %v880, 32
      %v887 = vpop.permute.xlu0 %886
      %888 = vrot.lane.b32.xlu0 %v881, 32
      %v889 = vpop.permute.xlu0 %888
      %v892 = vmul.f32 %v878, %v887
      %v893 = vmul.f32 %v879, %v889
      %896 = vrot.lane.b32.xlu0 %v892, 32
      %v897 = vpop.permute.xlu0 %896
      %898 = vrot.lane.b32.xlu0 %v893, 32
      %v899 = vpop.permute.xlu0 %898
      %v902 = vadd.f32 %v882, %v897
      %v903 = vadd.f32 %v883, %v899
      %v904 = vtanh.pop %v902
      %v905 = vtanh.pop %v903
      %908 = vrot.lane.b32.xlu0 %v904, 32
      %v909 = vpop.permute.xlu0 %908
      %910 = vrot.lane.b32.xlu0 %v905, 32
      %v911 = vpop.permute.xlu0 %910
      %v914 = vmul.f32 %v878, %v909
      %v915 = vmul.f32 %v879, %v911
      %s916 = sadd.s32 %s61, 6
      %v917 = vstv %s916
      %vm918 = vcmp.lt.s32.totalorder %v917, %v67
      %vm919 = vcmp.lt.s32.totalorder %v917, %v68
      %v920 = vsel %vm918, 1, 0
      %v921 = vsel %vm919, 1, 0
      %922 = vset.pattern.permute.xlu0 0
      %923 = vperm.xlu0 %922, %v920
      %v924 = vpop.permute.xlu0 %923
      %925 = vset.pattern.permute.xlu0 0
      %926 = vperm.xlu0 %925, %v921
      %v927 = vpop.permute.xlu0 %926
      %vm928 = vcmp.eq.s32.totalorder %v924, 1
      %vm929 = vcmp.eq.s32.totalorder %v927, 1
      %v930 = vsel %vm928, %v914, %v811
      %v931 = vsel %vm929, %v915, %v812
      %v932 = vsel %vm928, %v902, %v813
      %v933 = vsel %vm929, %v903, %v814
      %s934 = scalar_lea.vmem [#allocation6], 56
      %v935 = vld [vmem:[%s934] sm:$0xf]
      %v936 = vld [vmem:[%s934 + $0x4] sm:$0xf]
      %v937 = vunpack.c.l.bf16 %v935
      %v938 = vunpack.c.l.bf16 %v936
      %v939 = vpack.c.bf16 %v931, %v930
      %941 = vrot.lane.b32.xlu0 %v939, 64
      %v942 = vpop.permute.xlu0 %941
      %v944 = vsel %vm94, %v942, 0
      %946 = vmatprep.subr.bf16.mxu0 0
      %947 = vmatpush1.bf16.msra.mxu0 %v90
      %948 = vmatprep.subr.bf16.mxu0 0
      %949 = vmatpush1.bf16.msra.mxu0 %v91
      %950 = vmatprep.subr.bf16.mxu0 0
      %951 = vmatpush1.bf16.msra.mxu0 0
      %952 = vmatprep.subr.bf16.mxu0 0
      %953 = vmatpush1.bf16.msra.mxu0 0
      %954 = vmatprep.subr.bf16.mxu0 0
      %955 = vmatpush1.bf16.msra.mxu0 0
      %956 = vmatprep.subr.bf16.mxu0 0
      %957 = vmatpush1.bf16.msra.mxu0 0
      %958 = vmatprep.subr.bf16.mxu0 0
      %959 = vmatpush1.bf16.msra.mxu0 0
      %960 = vmatprep.subr.bf16.mxu0 0
      %961 = vmatpush1.bf16.msra.mxu0 0
      %962 = vmatprep.subr.bf16.mxu0 0
      %963 = vmatpush1.bf16.msra.mxu0 0
      %964 = vmatprep.subr.bf16.mxu0 0
      %965 = vmatpush1.bf16.msra.mxu0 0
      %966 = vmatprep.subr.bf16.mxu0 0
      %967 = vmatpush1.bf16.msra.mxu0 0
      %968 = vmatprep.subr.bf16.mxu0 0
      %969 = vmatpush1.bf16.msra.mxu0 0
      %970 = vmatprep.subr.bf16.mxu0 0
      %971 = vmatpush1.bf16.msra.mxu0 0
      %972 = vmatprep.subr.bf16.mxu0 0
      %973 = vmatpush1.bf16.msra.mxu0 0
      %974 = vmatprep.subr.bf16.mxu0 0
      %975 = vmatpush1.bf16.msra.mxu0 0
      %976 = vmatprep.subr.bf16.mxu0 0
      %977 = vmatpush1.bf16.msra.mxu0 0
      %978 = vmatprep.mubr.bf16.mxu0 0
      %979 = vmatmul.mubr.bf16.gmra.mrb[0].mxu0 %v944
      %v980 = vpop.f32.mrb[0].mxu0
      %v981 = vadd.f32 0.0, %v980
      %v982 = vpop.f32.mrb[0].mxu0
      %v983 = vpop.f32.mrb[0].mxu0
      %v984 = vadd.f32 0.0, %v983
      %v985 = vpop.f32.mrb[0].mxu0
      %986 = vdwg.mxu0
      %v987 = vadd.f32 %v937, %v981
      %v988 = vadd.f32 %v938, %v984
      %v989 = vsub.f32 0.0, %v987
      %v990 = vsub.f32 0.0, %v988
      %v991 = vmul.f32 %v989, 1.442695
      %v992 = vpow.pop %v991
      %v993 = vmul.f32 %v990, 1.442695
      %v994 = vpow.pop %v993
      %v995 = vadd.f32 %v992, 1.0
      %v996 = vadd.f32 %v994, 1.0
      %v997 = vrcp.pop %v995
      %v998 = vrcp.pop %v996
      %v999 = vtanh.pop %v987
      %v1000 = vtanh.pop %v988
      %v1001 = vmul.f32 %v997, %v932
      %v1002 = vmul.f32 %v998, %v933
      %1005 = vrot.lane.b32.xlu0 %v999, 32
      %v1006 = vpop.permute.xlu0 %1005
      %1007 = vrot.lane.b32.xlu0 %v1000, 32
      %v1008 = vpop.permute.xlu0 %1007
      %v1011 = vmul.f32 %v997, %v1006
      %v1012 = vmul.f32 %v998, %v1008
      %1015 = vrot.lane.b32.xlu0 %v1011, 32
      %v1016 = vpop.permute.xlu0 %1015
      %1017 = vrot.lane.b32.xlu0 %v1012, 32
      %v1018 = vpop.permute.xlu0 %1017
      %v1021 = vadd.f32 %v1001, %v1016
      %v1022 = vadd.f32 %v1002, %v1018
      %v1023 = vtanh.pop %v1021
      %v1024 = vtanh.pop %v1022
      %1027 = vrot.lane.b32.xlu0 %v1023, 32
      %v1028 = vpop.permute.xlu0 %1027
      %1029 = vrot.lane.b32.xlu0 %v1024, 32
      %v1030 = vpop.permute.xlu0 %1029
      %v1033 = vmul.f32 %v997, %v1028
      %v1034 = vmul.f32 %v998, %v1030
      %s1035 = sadd.s32 %s61, 7
      %v1036 = vstv %s1035
      %vm1037 = vcmp.lt.s32.totalorder %v1036, %v67
      %vm1038 = vcmp.lt.s32.totalorder %v1036, %v68
      %v1039 = vsel %vm1037, 1, 0
      %v1040 = vsel %vm1038, 1, 0
      %1041 = vset.pattern.permute.xlu0 0
      %1042 = vperm.xlu0 %1041, %v1039
      %v1043 = vpop.permute.xlu0 %1042
      %1044 = vset.pattern.permute.xlu0 0
      %1045 = vperm.xlu0 %1044, %v1040
      %v1046 = vpop.permute.xlu0 %1045
      %vm1047 = vcmp.eq.s32.totalorder %v1043, 1
      %vm1048 = vcmp.eq.s32.totalorder %v1046, 1
      %v1049 = vsel %vm1047, %v1033, %v930
      %v1050 = vsel %vm1048, %v1034, %v931
      %v1051 = vsel %vm1047, %v1021, %v932
      %v1052 = vsel %vm1048, %v1022, %v933
      %1055 = vrot.lane.b32.xlu0 %v1049, 64
      %v1056 = vpop.permute.xlu0 %1055
      %1057 = vrot.lane.b32.xlu0 %v1050, 64
      %v1058 = vpop.permute.xlu0 %1057
      %1061 = vst.msk [vmem:[#allocation2] sm:$0xff] %vm94, %v1056
      %1062 = vst.msk [vmem:[#allocation2 + $0x8] sm:$0xff] %vm94, %v1058
      %1065 = vrot.lane.b32.xlu0 %v1051, 96
      %v1066 = vpop.permute.xlu0 %1065
      %1067 = vrot.lane.b32.xlu0 %v1052, 96
      %v1068 = vpop.permute.xlu0 %1067
      %1071 = vst.msk [vmem:[#allocation3] sm:$0xff] %vm94, %v1066
      %1072 = vst.msk [vmem:[#allocation3 + $0x8] sm:$0xff] %vm94, %v1068
    $region37: #{tpu_custom_call.1} parent=1 // pred_fallthru
      _
    // Predicated region
    $region38: #{tpu_custom_call.1} parent=1 // pred_check
      %p1073 = pneg %p52
    $region39: #{tpu_custom_call.1} parent=1 // pred_check_branch
      %1075 = sbr.rel (%p1073) target = $region41
    $region40: #{tpu_custom_call.1} parent=1 // pred_region
      %v1076 = vld [vmem:[#allocation2] sm:$0xff]
      %v1077 = vld [vmem:[#allocation2 + $0x8] sm:$0xff]
      %v1078 = vld [vmem:[%s4] sm:$0xff]
      %v1079 = vld [vmem:[%s4 + $0x8] sm:$0xff]
      %v1080 = vld [vmem:[%s4 + $0x10] sm:$0xff]
      %v1081 = vld [vmem:[%s4 + $0x18] sm:$0xff]
      %v1082 = vld [vmem:[%s5] sm:$0x1]
      %v1084 = vlaneseq
      %v1085 = vshrl.u32 %v1084, 7
      %v1086 = vsub.s32 0, %v1085
      %v1087 = vrot.slane %v1082, %v1086
      %vm1089 = vcmask 261120
      %v1091 = vsel %vm1089, %v1076, 0
      %v1094 = vsel %vm1089, %v1077, 0
      %1096 = vmatprep.subr.mxu0 0.0
      %1097 = vmatpush1.msra.mxu0 %v1078
      %1098 = vmatprep.subr.mxu0 0.0
      %1099 = vmatpush1.msra.mxu0 %v1079
      %1100 = vmatprep.subr.mxu0 0.0
      %1101 = vmatpush1.msra.mxu0 %v1080
      %1102 = vmatprep.subr.mxu0 0.0
      %1103 = vmatpush1.msra.mxu0 %v1081
      %1104 = vmatprep.subr.mxu0 0.0
      %1105 = vmatpush1.msra.mxu0 0.0
      %1106 = vmatprep.subr.mxu0 0.0
      %1107 = vmatpush1.msra.mxu0 0.0
      %1108 = vmatprep.subr.mxu0 0.0
      %1109 = vmatpush1.msra.mxu0 0.0
      %1110 = vmatprep.subr.mxu0 0.0
      %1111 = vmatpush1.msra.mxu0 0.0
      %1112 = vmatprep.subr.mxu0 0.0
      %1113 = vmatpush1.msra.mxu0 0.0
      %1114 = vmatprep.subr.mxu0 0.0
      %1115 = vmatpush1.msra.mxu0 0.0
      %1116 = vmatprep.subr.mxu0 0.0
      %1117 = vmatpush1.msra.mxu0 0.0
      %1118 = vmatprep.subr.mxu0 0.0
      %1119 = vmatpush1.msra.mxu0 0.0
      %1120 = vmatprep.subr.mxu0 0.0
      %1121 = vmatpush1.msra.mxu0 0.0
      %1122 = vmatprep.subr.mxu0 0.0
      %1123 = vmatpush1.msra.mxu0 0.0
      %1124 = vmatprep.subr.mxu0 0.0
      %1125 = vmatpush1.msra.mxu0 0.0
      %1126 = vmatprep.subr.mxu0 0.0
      %1127 = vmatpush1.msra.mxu0 0.0
      %1128 = vmatprep.subr.mxu0 0.0
      %1129 = vmatpush1.msra.mxu0 0.0
      %1130 = vmatprep.subr.mxu0 0.0
      %1131 = vmatpush1.msra.mxu0 0.0
      %1132 = vmatprep.subr.mxu0 0.0
      %1133 = vmatpush1.msra.mxu0 0.0
      %1134 = vmatprep.subr.mxu0 0.0
      %1135 = vmatpush1.msra.mxu0 0.0
      %1136 = vmatprep.subr.mxu0 0.0
      %1137 = vmatpush1.msra.mxu0 0.0
      %1138 = vmatprep.subr.mxu0 0.0
      %1139 = vmatpush1.msra.mxu0 0.0
      %1140 = vmatprep.subr.mxu0 0.0
      %1141 = vmatpush1.msra.mxu0 0.0
      %1142 = vmatprep.subr.mxu0 0.0
      %1143 = vmatpush1.msra.mxu0 0.0
      %1144 = vmatprep.subr.mxu0 0.0
      %1145 = vmatpush1.msra.mxu0 0.0
      %1146 = vmatprep.subr.mxu0 0.0
      %1147 = vmatpush1.msra.mxu0 0.0
      %1148 = vmatprep.subr.mxu0 0.0
      %1149 = vmatpush1.msra.mxu0 0.0
      %1150 = vmatprep.subr.mxu0 0.0
      %1151 = vmatpush1.msra.mxu0 0.0
      %1152 = vmatprep.subr.mxu0 0.0
      %1153 = vmatpush1.msra.mxu0 0.0
      %1154 = vmatprep.subr.mxu0 0.0
      %1155 = vmatpush1.msra.mxu0 0.0
      %1156 = vmatprep.subr.mxu0 0.0
      %1157 = vmatpush1.msra.mxu0 0.0
      %1158 = vmatprep.subr.mxu0 0.0
      %1159 = vmatpush1.msra.mxu0 0.0
      %1160 = vmatprep.mubr.f32.mxu0 0.0
      %1161 = vmatmul.mubr.f32.gmra.mrb[0].mxu0 %v1091
      %v1162 = vpop.f32.mrb[0].mxu0
      %v1163 = vadd.f32 %v1087, %v1162
      %v1164 = vpop.f32.mrb[0].mxu0
      %1165 = vmatprep.mubr.f32.mxu0 0.0
      %1166 = vmatmul.mubr.f32.gmra.mrb[0].mxu0 %v1094
      %v1167 = vpop.f32.mrb[0].mxu0
      %v1168 = vadd.f32 %v1087, %v1167
      %v1169 = vpop.f32.mrb[0].mxu0
      %1170 = vdwg.mxu0
      %1171 = vst [vmem:[#allocation11] sm:$0xff] %v1163
      %1172 = vst [vmem:[#allocation11 + $0x8] sm:$0xff] %v1168
    $region41: #{tpu_custom_call.1} parent=1 // pred_fallthru
      _
    // Predicated region
    $region42: #{tpu_custom_call.1} parent=1 // pred_check
      _
    $region43: #{tpu_custom_call.1} parent=1 // pred_check_branch
      %1174 = sbr.rel (0) target = $region45
    $region44: #{tpu_custom_call.1} parent=1 // pred_region
      %s1176 = ssub.s32 256, 256
      %1177 = vsyncadd [#allocation8], %s1176
      %s1178 = sshll.u32 [#allocation11], 4
      %s1179 = int_to_ptr.vmem [resolvable:$true] %s1178
      %1184 = dma.vmem_to_hbm [thread:$0]  %s1179, 256, %s6, [#allocation8], 128, 128, 8
    $region45: #{tpu_custom_call.1} parent=1 // pred_fallthru
      _
    // Predicated region
    $region46: #{tpu_custom_call.1} parent=1 // pred_check
      _
    $region47: #{tpu_custom_call.1} parent=1 // pred_check_branch
      %1186 = sbr.rel (0) target = $region49
    $region48: #{tpu_custom_call.1} parent=1 // pred_region
      %1187 = dma.done [#allocation8], 256
    $region49: #{tpu_custom_call.1} parent=1 // pred_fallthru
      _
    %1188 = vsyncpa [#allocation7], 1
    %1189 = vsyncpa [#allocation10], 1
    %1190 = vsyncpa [#allocation8], 1

</llo_original>
